<compile_context>
chip_gen: v7x
topology: tpu7x:2x2x1
jax: 0.10.0
libtpu: 0.0.40
codegen_flags: <defaults>
</compile_context>

<pallas_src>
import jax
import jax.numpy as jnp
from jax.experimental import pallas as pl
from jax.experimental.pallas import tpu as pltpu

N_HIDDEN = 512
N_OUT = 10            # true number of output features (fc4)
N_OUT_PAD = 128       # lane-dense padded output width


def _round_up(x, m):
    return ((x + m - 1) // m) * m


def _pick_tile(B):
    """Batch-tile rows. Tiny B: one 16-row-aligned step (latency path).
    Larger B: >= 2 grid steps (v7x dual-TC), capped at 512 rows per tile."""
    if B <= 64:
        return _round_up(B, 16)
    return min(512, _round_up(pl.cdiv(B, 2), 16))


def _swish_bf16(x):
    # swish(x) = x*sigmoid(x) = 0.5*x*(1 + tanh(x/2)) : one EUP transcendental
    # (vs exp + reciprocal), overflow-free; mul/add land on the VALU which has
    # slack. Result cast to bf16 so the live inter-layer tensor is half-width.
    return (0.5 * x * (1.0 + jnp.tanh(0.5 * x))).astype(jnp.bfloat16)


def text_decoder_kernel(z_ref,
                        w1_ref, b1_ref,
                        w2_ref, b2_ref,
                        w3_ref, b3_ref,
                        w4_ref, b4_ref,
                        out_ref):
    # z arrives as bf16; all matmuls run on the MXU with f32 accumulation,
    # bias-add + swish in f32, then immediately back to bf16.
    h = _swish_bf16(jnp.dot(z_ref[...], w1_ref[...],
                            preferred_element_type=jnp.float32) + b1_ref[...])
    h = _swish_bf16(jnp.dot(h, w2_ref[...],
                            preferred_element_type=jnp.float32) + b2_ref[...])
    h = _swish_bf16(jnp.dot(h, w3_ref[...],
                            preferred_element_type=jnp.float32) + b3_ref[...])
    out = jnp.dot(h, w4_ref[...],
                  preferred_element_type=jnp.float32) + b4_ref[...]
    out_ref[...] = out.astype(out_ref.dtype)


def text_decoder(z, params):
    """Fused TextDecoder forward. z: (B, n_latents). Returns (B, 10) f32."""
    (w1, b1), (w2, b2), (w3, b3), (w4, b4) = params
    B, n_lat = z.shape
    n_out_pad = w4.shape[1]

    tm = _pick_tile(B)
    b_pad = _round_up(B, tm)

    z = z.astype(jnp.bfloat16)            # half the z DMA bytes
    if b_pad != B:
        z = jnp.pad(z, ((0, b_pad - B), (0, 0)))

    grid = (b_pad // tm,)

    # Weights/biases: full-array blocks with a constant index_map -> fetched
    # once and VMEM-resident across all batch-grid steps (no re-DMA). Total
    # weight footprint ~1.2 MB bf16 (double-buffered ~2.4 MB), far under the
    # 16 MiB limit even with tm=512 activation/output tiles.
    resident = lambda a: pl.BlockSpec(a.shape, lambda i: (0,) * a.ndim)

    out_padded = pl.pallas_call(
        text_decoder_kernel,
        out_shape=jax.ShapeDtypeStruct((b_pad, n_out_pad), jnp.float32),
        grid=grid,
        in_specs=[
            pl.BlockSpec((tm, n_lat), lambda i: (i, 0)),   # z tile (pipelined)
            resident(w1), resident(b1),
            resident(w2), resident(b2),
            resident(w3), resident(b3),
            resident(w4), resident(b4),
        ],
        out_specs=pl.BlockSpec((tm, n_out_pad), lambda i: (i, 0)),
        compiler_params=pltpu.CompilerParams(
            dimension_semantics=("parallel",),     # both TCs on v7x (grid >= 2)
            vmem_limit_bytes=16 << 20,
        ),
    )(z, w1, b1, w2, b2, w3, b3, w4, b4)

    return out_padded[:B, :N_OUT]


def init_params(key, n_latents):
    """Deterministic init mirroring torch.nn.Linear default:
    U(-1/sqrt(fan_in), 1/sqrt(fan_in)) for weight and bias.
    Weights stored (in_features, out_features) in bfloat16; biases f32.
    Layer 4 is zero-padded from 10 -> 128 output features (lane-dense stores)."""
    dims = [(n_latents, N_HIDDEN), (N_HIDDEN, N_HIDDEN),
            (N_HIDDEN, N_HIDDEN), (N_HIDDEN, N_OUT)]
    params = []
    for li, (fan_in, fan_out) in enumerate(dims):
        key, kw, kb = jax.random.split(key, 3)
        bound = 1.0 / jnp.sqrt(jnp.float32(fan_in))
        w = jax.random.uniform(kw, (fan_in, fan_out), jnp.float32, -bound, bound)
        b = jax.random.uniform(kb, (1, fan_out), jnp.float32, -bound, bound)
        if li == len(dims) - 1:          # pad fc4 to 128 lanes with zeros
            w = jnp.pad(w, ((0, 0), (0, N_OUT_PAD - fan_out)))
            b = jnp.pad(b, ((0, 0), (0, N_OUT_PAD - fan_out)))
        params.append((w.astype(jnp.bfloat16), b.astype(jnp.float32)))
    return params


def text_decoder_ref(z, params):
    """Pure-JAX reference mirroring the kernel's dtype choices
    (bf16 weights / inter-layer activations, f32 accumulation, exact sigmoid)."""
    h = z.astype(jnp.bfloat16)
    for i, (w, b) in enumerate(params):
        h = jnp.dot(h, w, preferred_element_type=jnp.float32) + b
        if i < len(params) - 1:
            h = (h * jax.nn.sigmoid(h)).astype(jnp.bfloat16)
    return h[:, :N_OUT]


if __name__ == "__main__":
    key = jax.random.PRNGKey(0)
    n_latents = 32

    kz1, kz2, kp = jax.random.split(key, 3)
    params = init_params(kp, n_latents)

    # Small latency-path batch (single grid step).
    z_small = jax.random.normal(kz1, (8, n_latents), jnp.float32)
    out_small = jax.block_until_ready(text_decoder(z_small, params))
    ref_small = text_decoder_ref(z_small, params)
    assert out_small.shape == (8, N_OUT), out_small.shape
    assert jnp.allclose(out_small, ref_small, atol=2e-2, rtol=2e-2), (
        float(jnp.max(jnp.abs(out_small - ref_small))))

    # Larger batch exercising the multi-step "parallel" grid path.
    z_big = jax.random.normal(kz2, (96, n_latents), jnp.float32)
    out_big = jax.block_until_ready(text_decoder(z_big, params))
    ref_big = text_decoder_ref(z_big, params)
    assert out_big.shape == (96, N_OUT), out_big.shape
    assert jnp.allclose(out_big, ref_big, atol=2e-2, rtol=2e-2), (
        float(jnp.max(jnp.abs(out_big - ref_big))))

    print("KERNEL_OK")
</pallas_src>

<mosaic_0001>
module attributes {stable_mosaic.version = 11 : i64} {
  func.func @text_decoder_kernel(%arg0: i32, %arg1: memref<16x32xbf16, #tpu.memory_space<vmem>>, %arg2: memref<32x512xbf16, #tpu.memory_space<vmem>>, %arg3: memref<1x512xf32, #tpu.memory_space<vmem>>, %arg4: memref<512x512xbf16, #tpu.memory_space<vmem>>, %arg5: memref<1x512xf32, #tpu.memory_space<vmem>>, %arg6: memref<512x512xbf16, #tpu.memory_space<vmem>>, %arg7: memref<1x512xf32, #tpu.memory_space<vmem>>, %arg8: memref<512x128xbf16, #tpu.memory_space<vmem>>, %arg9: memref<1x128xf32, #tpu.memory_space<vmem>>, %arg10: memref<16x128xf32, #tpu.memory_space<vmem>>) attributes {dimension_semantics = [#tpu.dimension_semantics<parallel>], iteration_bounds = array<i64: 1>, scalar_prefetch = 0 : i64, scratch_operands = 0 : i64, tpu.core_type = #tpu.core_type<tc>, window_params = [{transform_indices = @transform_0, window_bounds = array<i64: 16, 32>}, {pipeline_mode = #tpu.pipeline_mode<synchronous>, transform_indices = @transform_1, window_bounds = array<i64: 32, 512>}, {pipeline_mode = #tpu.pipeline_mode<synchronous>, transform_indices = @transform_2, window_bounds = array<i64: 1, 512>}, {pipeline_mode = #tpu.pipeline_mode<synchronous>, transform_indices = @transform_3, window_bounds = array<i64: 512, 512>}, {pipeline_mode = #tpu.pipeline_mode<synchronous>, transform_indices = @transform_4, window_bounds = array<i64: 1, 512>}, {pipeline_mode = #tpu.pipeline_mode<synchronous>, transform_indices = @transform_5, window_bounds = array<i64: 512, 512>}, {pipeline_mode = #tpu.pipeline_mode<synchronous>, transform_indices = @transform_6, window_bounds = array<i64: 1, 512>}, {pipeline_mode = #tpu.pipeline_mode<synchronous>, transform_indices = @transform_7, window_bounds = array<i64: 512, 128>}, {pipeline_mode = #tpu.pipeline_mode<synchronous>, transform_indices = @transform_8, window_bounds = array<i64: 1, 128>}, {transform_indices = @transform_9, window_bounds = array<i64: 16, 128>}]} {
    %c0 = arith.constant 0 : index
    %c0_0 = arith.constant 0 : index
    %0 = vector.load %arg1[%c0, %c0_0] : memref<16x32xbf16, #tpu.memory_space<vmem>>, vector<16x32xbf16>
    %c0_1 = arith.constant 0 : index
    %c0_2 = arith.constant 0 : index
    %1 = vector.load %arg2[%c0_1, %c0_2] : memref<32x512xbf16, #tpu.memory_space<vmem>>, vector<32x512xbf16>
    %cst = arith.constant dense<0.000000e+00> : vector<16x512xf32>
    %2 = tpu.matmul %0, %1, %cst {dimension_numbers = #tpu.dot_dimension_numbers<[1], [0], [0], [1], [0, 0, 1, 1], [], []>} : vector<16x32xbf16>, vector<32x512xbf16>, vector<16x512xf32> -> vector<16x512xf32>
    %c0_3 = arith.constant 0 : index
    %c0_4 = arith.constant 0 : index
    %3 = vector.load %arg3[%c0_3, %c0_4] : memref<1x512xf32, #tpu.memory_space<vmem>>, vector<1x512xf32>
    %4 = vector.broadcast %3 : vector<1x512xf32> to vector<16x512xf32>
    %5 = arith.addf %2, %4 : vector<16x512xf32>
    %cst_5 = arith.constant 5.000000e-01 : f32
    %6 = vector.broadcast %cst_5 : f32 to vector<16x512xf32>
    %7 = arith.mulf %6, %5 : vector<16x512xf32>
    %cst_6 = arith.constant 5.000000e-01 : f32
    %8 = vector.broadcast %cst_6 : f32 to vector<16x512xf32>
    %9 = arith.mulf %8, %5 : vector<16x512xf32>
    %10 = math.tanh %9 : vector<16x512xf32>
    %cst_7 = arith.constant 1.000000e+00 : f32
    %11 = vector.broadcast %cst_7 : f32 to vector<16x512xf32>
    %12 = arith.addf %11, %10 : vector<16x512xf32>
    %13 = arith.mulf %7, %12 : vector<16x512xf32>
    %14 = arith.truncf %13 : vector<16x512xf32> to vector<16x512xbf16>
    %c0_8 = arith.constant 0 : index
    %c0_9 = arith.constant 0 : index
    %15 = vector.load %arg4[%c0_8, %c0_9] : memref<512x512xbf16, #tpu.memory_space<vmem>>, vector<512x512xbf16>
    %cst_10 = arith.constant dense<0.000000e+00> : vector<16x512xf32>
    %16 = tpu.matmul %14, %15, %cst_10 {dimension_numbers = #tpu.dot_dimension_numbers<[1], [0], [0], [1], [0, 0, 1, 1], [], []>} : vector<16x512xbf16>, vector<512x512xbf16>, vector<16x512xf32> -> vector<16x512xf32>
    %c0_11 = arith.constant 0 : index
    %c0_12 = arith.constant 0 : index
    %17 = vector.load %arg5[%c0_11, %c0_12] : memref<1x512xf32, #tpu.memory_space<vmem>>, vector<1x512xf32>
    %18 = vector.broadcast %17 : vector<1x512xf32> to vector<16x512xf32>
    %19 = arith.addf %16, %18 : vector<16x512xf32>
    %cst_13 = arith.constant 5.000000e-01 : f32
    %20 = vector.broadcast %cst_13 : f32 to vector<16x512xf32>
    %21 = arith.mulf %20, %19 : vector<16x512xf32>
    %cst_14 = arith.constant 5.000000e-01 : f32
    %22 = vector.broadcast %cst_14 : f32 to vector<16x512xf32>
    %23 = arith.mulf %22, %19 : vector<16x512xf32>
    %24 = math.tanh %23 : vector<16x512xf32>
    %cst_15 = arith.constant 1.000000e+00 : f32
    %25 = vector.broadcast %cst_15 : f32 to vector<16x512xf32>
    %26 = arith.addf %25, %24 : vector<16x512xf32>
    %27 = arith.mulf %21, %26 : vector<16x512xf32>
    %28 = arith.truncf %27 : vector<16x512xf32> to vector<16x512xbf16>
    %c0_16 = arith.constant 0 : index
    %c0_17 = arith.constant 0 : index
    %29 = vector.load %arg6[%c0_16, %c0_17] : memref<512x512xbf16, #tpu.memory_space<vmem>>, vector<512x512xbf16>
    %cst_18 = arith.constant dense<0.000000e+00> : vector<16x512xf32>
    %30 = tpu.matmul %28, %29, %cst_18 {dimension_numbers = #tpu.dot_dimension_numbers<[1], [0], [0], [1], [0, 0, 1, 1], [], []>} : vector<16x512xbf16>, vector<512x512xbf16>, vector<16x512xf32> -> vector<16x512xf32>
    %c0_19 = arith.constant 0 : index
    %c0_20 = arith.constant 0 : index
    %31 = vector.load %arg7[%c0_19, %c0_20] : memref<1x512xf32, #tpu.memory_space<vmem>>, vector<1x512xf32>
    %32 = vector.broadcast %31 : vector<1x512xf32> to vector<16x512xf32>
    %33 = arith.addf %30, %32 : vector<16x512xf32>
    %cst_21 = arith.constant 5.000000e-01 : f32
    %34 = vector.broadcast %cst_21 : f32 to vector<16x512xf32>
    %35 = arith.mulf %34, %33 : vector<16x512xf32>
    %cst_22 = arith.constant 5.000000e-01 : f32
    %36 = vector.broadcast %cst_22 : f32 to vector<16x512xf32>
    %37 = arith.mulf %36, %33 : vector<16x512xf32>
    %38 = math.tanh %37 : vector<16x512xf32>
    %cst_23 = arith.constant 1.000000e+00 : f32
    %39 = vector.broadcast %cst_23 : f32 to vector<16x512xf32>
    %40 = arith.addf %39, %38 : vector<16x512xf32>
    %41 = arith.mulf %35, %40 : vector<16x512xf32>
    %42 = arith.truncf %41 : vector<16x512xf32> to vector<16x512xbf16>
    %c0_24 = arith.constant 0 : index
    %c0_25 = arith.constant 0 : index
    %43 = vector.load %arg8[%c0_24, %c0_25] : memref<512x128xbf16, #tpu.memory_space<vmem>>, vector<512x128xbf16>
    %cst_26 = arith.constant dense<0.000000e+00> : vector<16x128xf32>
    %44 = tpu.matmul %42, %43, %cst_26 {dimension_numbers = #tpu.dot_dimension_numbers<[1], [0], [0], [1], [0, 0, 1, 1], [], []>} : vector<16x512xbf16>, vector<512x128xbf16>, vector<16x128xf32> -> vector<16x128xf32>
    %c0_27 = arith.constant 0 : index
    %c0_28 = arith.constant 0 : index
    %45 = vector.load %arg9[%c0_27, %c0_28] : memref<1x128xf32, #tpu.memory_space<vmem>>, vector<1x128xf32>
    %46 = vector.broadcast %45 : vector<1x128xf32> to vector<16x128xf32>
    %47 = arith.addf %44, %46 : vector<16x128xf32>
    %c0_29 = arith.constant 0 : index
    %c0_30 = arith.constant 0 : index
    %48 = vector.load %arg10[%c0_29, %c0_30] : memref<16x128xf32, #tpu.memory_space<vmem>>, vector<16x128xf32>
    tpu.vector_store %arg10[%c0_29, %c0_30], %47 {strides = array<i32>} : memref<16x128xf32, #tpu.memory_space<vmem>>, vector<16x128xf32>,
    return
  }
  func.func @transform_0(%arg0: i32) -> (i32, i32) {
    %c0_i32 = arith.constant 0 : i32
    %c0_i32_0 = arith.constant 0 : i32
    return %arg0, %c0_i32 : i32, i32
  }
  func.func @transform_1(%arg0: i32) -> (i32, i32) {
    %c0_i32 = arith.constant 0 : i32
    %c0_i32_0 = arith.constant 0 : i32
    %c0_i32_1 = arith.constant 0 : i32
    return %c0_i32, %c0_i32_0 : i32, i32
  }
  func.func @transform_2(%arg0: i32) -> (i32, i32) {
    %c0_i32 = arith.constant 0 : i32
    %c0_i32_0 = arith.constant 0 : i32
    %c0_i32_1 = arith.constant 0 : i32
    return %c0_i32, %c0_i32_0 : i32, i32
  }
  func.func @transform_3(%arg0: i32) -> (i32, i32) {
    %c0_i32 = arith.constant 0 : i32
    %c0_i32_0 = arith.constant 0 : i32
    %c0_i32_1 = arith.constant 0 : i32
    return %c0_i32, %c0_i32_0 : i32, i32
  }
  func.func @transform_4(%arg0: i32) -> (i32, i32) {
    %c0_i32 = arith.constant 0 : i32
    %c0_i32_0 = arith.constant 0 : i32
    %c0_i32_1 = arith.constant 0 : i32
    return %c0_i32, %c0_i32_0 : i32, i32
  }
  func.func @transform_5(%arg0: i32) -> (i32, i32) {
    %c0_i32 = arith.constant 0 : i32
    %c0_i32_0 = arith.constant 0 : i32
    %c0_i32_1 = arith.constant 0 : i32
    return %c0_i32, %c0_i32_0 : i32, i32
  }
  func.func @transform_6(%arg0: i32) -> (i32, i32) {
    %c0_i32 = arith.constant 0 : i32
    %c0_i32_0 = arith.constant 0 : i32
    %c0_i32_1 = arith.constant 0 : i32
    return %c0_i32, %c0_i32_0 : i32, i32
  }
  func.func @transform_7(%arg0: i32) -> (i32, i32) {
    %c0_i32 = arith.constant 0 : i32
    %c0_i32_0 = arith.constant 0 : i32
    %c0_i32_1 = arith.constant 0 : i32
    return %c0_i32, %c0_i32_0 : i32, i32
  }
  func.func @transform_8(%arg0: i32) -> (i32, i32) {
    %c0_i32 = arith.constant 0 : i32
    %c0_i32_0 = arith.constant 0 : i32
    %c0_i32_1 = arith.constant 0 : i32
    return %c0_i32, %c0_i32_0 : i32, i32
  }
  func.func @transform_9(%arg0: i32) -> (i32, i32) {
    %c0_i32 = arith.constant 0 : i32
    %c0_i32_0 = arith.constant 0 : i32
    return %arg0, %c0_i32 : i32, i32
  }
}

</mosaic_0001>

<llo_original>
// kernel: tpu_custom_call.1
$region0: #{tpu_custom_call.1}
  #allocation0 [shape = 'u32[]', space=smem, size = 0x4, offset = 0x4, fixed_abs, tag = 'smem constant byte address 0x4 - core index']
  #allocation1 [shape = 'u32[144,128]{1,0:T(1,128)}', space=vmem, size = 0x12000, scoped, tag = 'internal scratch']
  %s0 = inlined_call_operand.hbm [shape: bf16[16,32], index: 0, kind: input, shape index: {}]
  %s1 = inlined_call_operand.hbm [shape: bf16[32,512], index: 1, kind: input, shape index: {}]
  %s2 = inlined_call_operand.vmem [shape: f32[1,512], index: 2, kind: input, shape index: {}]
  %s3 = inlined_call_operand.hbm [shape: bf16[512,512], index: 3, kind: input, shape index: {}]
  %s4 = inlined_call_operand.vmem [shape: f32[1,512], index: 4, kind: input, shape index: {}]
  %s5 = inlined_call_operand.hbm [shape: bf16[512,512], index: 5, kind: input, shape index: {}]
  %s6 = inlined_call_operand.vmem [shape: f32[1,512], index: 6, kind: input, shape index: {}]
  %s7 = inlined_call_operand.hbm [shape: bf16[512,128], index: 7, kind: input, shape index: {}]
  %s8 = inlined_call_operand.vmem [shape: f32[1,128], index: 8, kind: input, shape index: {}]
  %s9 = inlined_call_operand.hbm [shape: f32[16,128], index: 9, kind: output, shape index: {}]
  %s10 = sld [smem:[#allocation0]]
  $region66: #{tpu_custom_call.1} parent=0
    _
  %s12 = ssub.s32 1, %s10
  %s13 = scalar_select 0, %s12, %s10
  $region1: #{tpu_custom_call.1} parent=0
    #allocation2 [shape = 'u8[4096]{0}', space=vmem, size = 0x1000, scoped, tag = 'input window, operand 0, single buffered']
    #allocation3 [shape = 's32[1]{0}', space=sflag, size = 0x4, scoped, tag = 'scoped memory for tpu_custom_call.1']
    #allocation4 [shape = 's32[1]{0}', space=sflag, size = 0x4, scoped, tag = 'scoped memory for tpu_custom_call.1']
    #allocation5 [shape = 'u8[32768]{0}', space=vmem, size = 0x8000, scoped, tag = 'input window, operand 1, single buffered']
    #allocation6 [shape = 's32[1]{0}', space=sflag, size = 0x4, scoped, tag = 'scoped memory for tpu_custom_call.1']
    #allocation7 [shape = 'u8[524288]{0}', space=vmem, size = 0x80000, scoped, tag = 'input window, operand 3, single buffered']
    #allocation8 [shape = 'u8[524288]{0}', space=vmem, size = 0x80000, scoped, tag = 'input window, operand 5, single buffered']
    #allocation9 [shape = 's32[1]{0}', space=sflag, size = 0x4, scoped, tag = 'scoped memory for tpu_custom_call.1']
    #allocation10 [shape = 'u8[131072]{0}', space=vmem, size = 0x20000, scoped, tag = 'input window, operand 7, single buffered']
    #allocation11 [shape = 'u8[8192]{0}', space=vmem, size = 0x2000, scoped, tag = 'output window, operand 0, single buffered']
    %14 = vsyncpa [#allocation3], 0
    %15 = vsyncpa [#allocation6], 0
    %16 = vsyncpa [#allocation9], 0
    %17 = vsyncpa [#allocation4], 0
    // Predicated region
    $region2: #{tpu_custom_call.1} parent=1 // pred_check
      _
    $region3: #{tpu_custom_call.1} parent=1 // pred_check_branch
      %19 = sbr.rel (0) target = $region5
    $region4: #{tpu_custom_call.1} parent=1 // pred_region
      %s21 = ssub.s32 128, 128
      %22 = vsyncadd [#allocation3], %s21
      %s23 = sshll.u32 [#allocation2], 4
      %s24 = int_to_ptr.vmem [resolvable:$true] %s23
      %29 = dma.hbm_to_vmem [thread:$0]  %s0, 128, %s24, [#allocation3], 64, 64, 4
    $region5: #{tpu_custom_call.1} parent=1 // pred_fallthru
      _
    // Predicated region
    $region6: #{tpu_custom_call.1} parent=1 // pred_check
      _
    $region7: #{tpu_custom_call.1} parent=1 // pred_check_branch
      %31 = sbr.rel (0) target = $region9
    $region8: #{tpu_custom_call.1} parent=1 // pred_region
      %s33 = ssub.s32 1024, 1024
      %34 = vsyncadd [#allocation6], %s33
      %s35 = sshll.u32 [#allocation5], 4
      %s36 = int_to_ptr.vmem [resolvable:$true] %s35
      %41 = dma.hbm_to_vmem [thread:$0]  %s1, 1024, %s36, [#allocation6], 256, 256, 16
    $region9: #{tpu_custom_call.1} parent=1 // pred_fallthru
      _
    // Predicated region
    $region10: #{tpu_custom_call.1} parent=1 // pred_check
      _
    $region11: #{tpu_custom_call.1} parent=1 // pred_check_branch
      %43 = sbr.rel (0) target = $region13
    $region12: #{tpu_custom_call.1} parent=1 // pred_region
      _
    $region13: #{tpu_custom_call.1} parent=1 // pred_fallthru
      _
    // Predicated region
    $region14: #{tpu_custom_call.1} parent=1 // pred_check
      _
    $region15: #{tpu_custom_call.1} parent=1 // pred_check_branch
      %45 = sbr.rel (0) target = $region17
    $region16: #{tpu_custom_call.1} parent=1 // pred_region
      %s47 = ssub.s32 16384, 16384
      %48 = vsyncadd [#allocation6], %s47
      %s49 = sshll.u32 [#allocation7], 4
      %s50 = int_to_ptr.vmem [resolvable:$true] %s49
      %55 = dma.hbm_to_vmem [thread:$0]  %s3, 16384, %s50, [#allocation6], 256, 256, 16
    $region17: #{tpu_custom_call.1} parent=1 // pred_fallthru
      _
    // Predicated region
    $region18: #{tpu_custom_call.1} parent=1 // pred_check
      _
    $region19: #{tpu_custom_call.1} parent=1 // pred_check_branch
      %57 = sbr.rel (0) target = $region21
    $region20: #{tpu_custom_call.1} parent=1 // pred_region
      _
    $region21: #{tpu_custom_call.1} parent=1 // pred_fallthru
      _
    // Predicated region
    $region22: #{tpu_custom_call.1} parent=1 // pred_check
      _
    $region23: #{tpu_custom_call.1} parent=1 // pred_check_branch
      %59 = sbr.rel (0) target = $region25
    $region24: #{tpu_custom_call.1} parent=1 // pred_region
      %s61 = ssub.s32 16384, 16384
      %62 = vsyncadd [#allocation9], %s61
      %s63 = sshll.u32 [#allocation8], 4
      %s64 = int_to_ptr.vmem [resolvable:$true] %s63
      %69 = dma.hbm_to_vmem [thread:$0]  %s5, 16384, %s64, [#allocation9], 256, 256, 16
    $region25: #{tpu_custom_call.1} parent=1 // pred_fallthru
      _
    // Predicated region
    $region26: #{tpu_custom_call.1} parent=1 // pred_check
      _
    $region27: #{tpu_custom_call.1} parent=1 // pred_check_branch
      %71 = sbr.rel (0) target = $region29
    $region28: #{tpu_custom_call.1} parent=1 // pred_region
      _
    $region29: #{tpu_custom_call.1} parent=1 // pred_fallthru
      _
    // Predicated region
    $region30: #{tpu_custom_call.1} parent=1 // pred_check
      _
    $region31: #{tpu_custom_call.1} parent=1 // pred_check_branch
      %73 = sbr.rel (0) target = $region33
    $region32: #{tpu_custom_call.1} parent=1 // pred_region
      %s75 = ssub.s32 4096, 4096
      %76 = vsyncadd [#allocation9], %s75
      %s77 = sshll.u32 [#allocation10], 4
      %s78 = int_to_ptr.vmem [resolvable:$true] %s77
      %83 = dma.hbm_to_vmem [thread:$0]  %s7, 4096, %s78, [#allocation9], 64, 64, 4
    $region33: #{tpu_custom_call.1} parent=1 // pred_fallthru
      _
    // Predicated region
    $region34: #{tpu_custom_call.1} parent=1 // pred_check
      _
    $region35: #{tpu_custom_call.1} parent=1 // pred_check_branch
      %85 = sbr.rel (0) target = $region37
    $region36: #{tpu_custom_call.1} parent=1 // pred_region
      _
    $region37: #{tpu_custom_call.1} parent=1 // pred_fallthru
      _
    // Predicated region
    $region38: #{tpu_custom_call.1} parent=1 // pred_check
      _
    $region39: #{tpu_custom_call.1} parent=1 // pred_check_branch
      %87 = sbr.rel (0) target = $region41
    $region40: #{tpu_custom_call.1} parent=1 // pred_region
      %88 = dma.done [#allocation3], 128
    $region41: #{tpu_custom_call.1} parent=1 // pred_fallthru
      _
    // Predicated region
    $region42: #{tpu_custom_call.1} parent=1 // pred_check
      _
    $region43: #{tpu_custom_call.1} parent=1 // pred_check_branch
      %90 = sbr.rel (0) target = $region45
    $region44: #{tpu_custom_call.1} parent=1 // pred_region
      %91 = dma.done [#allocation6], 1024
    $region45: #{tpu_custom_call.1} parent=1 // pred_fallthru
      _
    // Predicated region
    $region46: #{tpu_custom_call.1} parent=1 // pred_check
      _
    $region47: #{tpu_custom_call.1} parent=1 // pred_check_branch
      %93 = sbr.rel (0) target = $region49
    $region48: #{tpu_custom_call.1} parent=1 // pred_region
      %94 = dma.done [#allocation6], 16384
    $region49: #{tpu_custom_call.1} parent=1 // pred_fallthru
      _
    // Predicated region
    $region50: #{tpu_custom_call.1} parent=1 // pred_check
      _
    $region51: #{tpu_custom_call.1} parent=1 // pred_check_branch
      %96 = sbr.rel (0) target = $region53
    $region52: #{tpu_custom_call.1} parent=1 // pred_region
      %97 = dma.done [#allocation9], 16384
    $region53: #{tpu_custom_call.1} parent=1 // pred_fallthru
      _
    // Predicated region
    $region54: #{tpu_custom_call.1} parent=1 // pred_check
      _
    $region55: #{tpu_custom_call.1} parent=1 // pred_check_branch
      %99 = sbr.rel (0) target = $region57
    $region56: #{tpu_custom_call.1} parent=1 // pred_region
      %100 = dma.done [#allocation9], 4096
    $region57: #{tpu_custom_call.1} parent=1 // pred_fallthru
      _
    %v102 = vld [vmem:[#allocation2] sm:$0xf]
    %v103 = vld [vmem:[#allocation2 + $0x4] sm:$0xf]
    %v104 = vld [vmem:[#allocation5] sm:$0xff]
    %v105 = vld [vmem:[#allocation5 + $0x8] sm:$0xff]
    %v106 = vld [vmem:[#allocation5 + $0x10] sm:$0xff]
    %v107 = vld [vmem:[#allocation5 + $0x18] sm:$0xff]
    %v108 = vld [vmem:[#allocation5 + $0x20] sm:$0xff]
    %v109 = vld [vmem:[#allocation5 + $0x28] sm:$0xff]
    %v110 = vld [vmem:[#allocation5 + $0x30] sm:$0xff]
    %v111 = vld [vmem:[#allocation5 + $0x38] sm:$0xff]
    %v112 = vld [vmem:[%s2] sm:$0xf]
    %v114 = vlaneseq
    %v115 = vshrl.u32 %v114, 7
    %v116 = vsub.s32 0, %v115
    %v117 = vrot.slane %v112, %v116
    %v118 = vlaneseq
    %v119 = vshrl.u32 %v118, 7
    %v120 = vsub.s32 1, %v119
    %v121 = vrot.slane %v112, %v120
    %v122 = vlaneseq
    %v123 = vshrl.u32 %v122, 7
    %v124 = vsub.s32 2, %v123
    %v125 = vrot.slane %v112, %v124
    %v126 = vlaneseq
    %v127 = vshrl.u32 %v126, 7
    %v128 = vsub.s32 3, %v127
    %v129 = vrot.slane %v112, %v128
    %v136 = vunpack.c.l.b16 %v102
    %v137 = vunpack.c.l.b16 %v103
    %v138 = vpack.c.b16 %v137, %v136
    %v147 = vunpack.c.l.b16 %v104
    %v148 = vunpack.c.h.b16 %v104
    %v149 = vunpack.c.l.b16 %v105
    %v150 = vunpack.c.h.b16 %v105
    %v151 = vunpack.c.l.b16 %v106
    %v152 = vunpack.c.h.b16 %v106
    %v153 = vunpack.c.l.b16 %v107
    %v154 = vunpack.c.h.b16 %v107
    %v155 = vunpack.c.l.b16 %v108
    %v156 = vunpack.c.h.b16 %v108
    %v157 = vunpack.c.l.b16 %v109
    %v158 = vunpack.c.h.b16 %v109
    %v159 = vunpack.c.l.b16 %v110
    %v160 = vunpack.c.h.b16 %v110
    %v161 = vunpack.c.l.b16 %v111
    %v162 = vunpack.c.h.b16 %v111
    %v163 = vpack.c.b16 %v151, %v147
    %v164 = vpack.c.b16 %v152, %v148
    %v165 = vpack.c.b16 %v153, %v149
    %v166 = vpack.c.b16 %v154, %v150
    %v167 = vpack.c.b16 %v159, %v155
    %v168 = vpack.c.b16 %v160, %v156
    %v169 = vpack.c.b16 %v161, %v157
    %v170 = vpack.c.b16 %v162, %v158
    %vm179 = vcmask 261120
    %v181 = vsel %vm179, %v138, 0
    %183 = vmatprep.subr.bf16.mxu0 %v164
    %184 = vmatpush1.bf16.msra.mxu0 %v163
    %185 = vmatprep.subr.bf16.mxu0 %v168
    %186 = vmatpush1.bf16.msra.mxu0 %v167
    %187 = vmatprep.subr.bf16.mxu0 0
    %188 = vmatpush1.bf16.msra.mxu0 0
    %189 = vmatprep.subr.bf16.mxu0 0
    %190 = vmatpush1.bf16.msra.mxu0 0
    %191 = vmatprep.subr.bf16.mxu0 0
    %192 = vmatpush1.bf16.msra.mxu0 0
    %193 = vmatprep.subr.bf16.mxu0 0
    %194 = vmatpush1.bf16.msra.mxu0 0
    %195 = vmatprep.subr.bf16.mxu0 0
    %196 = vmatpush1.bf16.msra.mxu0 0
    %197 = vmatprep.subr.bf16.mxu0 0
    %198 = vmatpush1.bf16.msra.mxu0 0
    %199 = vmatprep.subr.bf16.mxu0 0
    %200 = vmatpush1.bf16.msra.mxu0 0
    %201 = vmatprep.subr.bf16.mxu0 0
    %202 = vmatpush1.bf16.msra.mxu0 0
    %203 = vmatprep.subr.bf16.mxu0 0
    %204 = vmatpush1.bf16.msra.mxu0 0
    %205 = vmatprep.subr.bf16.mxu0 0
    %206 = vmatpush1.bf16.msra.mxu0 0
    %207 = vmatprep.subr.bf16.mxu0 0
    %208 = vmatpush1.bf16.msra.mxu0 0
    %209 = vmatprep.subr.bf16.mxu0 0
    %210 = vmatpush1.bf16.msra.mxu0 0
    %211 = vmatprep.subr.bf16.mxu0 0
    %212 = vmatpush1.bf16.msra.mxu0 0
    %213 = vmatprep.subr.bf16.mxu0 0
    %214 = vmatpush1.bf16.msra.mxu0 0
    %215 = vmatprep.mubr.bf16.mxu0 0
    %216 = vmatmul.mubr.bf16.gmra.mrb[0].mxu0 %v181
    %v217 = vpop.f32.mrb[0].mxu0
    %v218 = vadd.f32 %v117, %v217
    %v219 = vpop.f32.mrb[0].mxu0
    %v220 = vadd.f32 %v121, %v219
    %v221 = vpop.f32.mrb[0].mxu0
    %v222 = vadd.f32 %v117, %v221
    %v223 = vpop.f32.mrb[0].mxu0
    %v224 = vadd.f32 %v121, %v223
    %225 = vdwg.mxu0
    %226 = vmatprep.subr.bf16.mxu0 %v166
    %227 = vmatpush1.bf16.msra.mxu0 %v165
    %228 = vmatprep.subr.bf16.mxu0 %v170
    %229 = vmatpush1.bf16.msra.mxu0 %v169
    %230 = vmatprep.subr.bf16.mxu0 0
    %231 = vmatpush1.bf16.msra.mxu0 0
    %232 = vmatprep.subr.bf16.mxu0 0
    %233 = vmatpush1.bf16.msra.mxu0 0
    %234 = vmatprep.subr.bf16.mxu0 0
    %235 = vmatpush1.bf16.msra.mxu0 0
    %236 = vmatprep.subr.bf16.mxu0 0
    %237 = vmatpush1.bf16.msra.mxu0 0
    %238 = vmatprep.subr.bf16.mxu0 0
    %239 = vmatpush1.bf16.msra.mxu0 0
    %240 = vmatprep.subr.bf16.mxu0 0
    %241 = vmatpush1.bf16.msra.mxu0 0
    %242 = vmatprep.subr.bf16.mxu0 0
    %243 = vmatpush1.bf16.msra.mxu0 0
    %244 = vmatprep.subr.bf16.mxu0 0
    %245 = vmatpush1.bf16.msra.mxu0 0
    %246 = vmatprep.subr.bf16.mxu0 0
    %247 = vmatpush1.bf16.msra.mxu0 0
    %248 = vmatprep.subr.bf16.mxu0 0
    %249 = vmatpush1.bf16.msra.mxu0 0
    %250 = vmatprep.subr.bf16.mxu0 0
    %251 = vmatpush1.bf16.msra.mxu0 0
    %252 = vmatprep.subr.bf16.mxu0 0
    %253 = vmatpush1.bf16.msra.mxu0 0
    %254 = vmatprep.subr.bf16.mxu0 0
    %255 = vmatpush1.bf16.msra.mxu0 0
    %256 = vmatprep.subr.bf16.mxu0 0
    %257 = vmatpush1.bf16.msra.mxu0 0
    %258 = vmatprep.mubr.bf16.mxu0 0
    %259 = vmatmul.mubr.bf16.gmra.mrb[0].mxu0 %v181
    %v260 = vpop.f32.mrb[0].mxu0
    %v261 = vadd.f32 %v125, %v260
    %v262 = vpop.f32.mrb[0].mxu0
    %v263 = vadd.f32 %v129, %v262
    %v264 = vpop.f32.mrb[0].mxu0
    %v265 = vadd.f32 %v125, %v264
    %v266 = vpop.f32.mrb[0].mxu0
    %v267 = vadd.f32 %v129, %v266
    %268 = vdwg.mxu0
    %v269 = vmul.f32 %v218, 0.5
    %v270 = vmul.f32 %v220, 0.5
    %v271 = vmul.f32 %v261, 0.5
    %v272 = vmul.f32 %v263, 0.5
    %v273 = vmul.f32 %v222, 0.5
    %v274 = vmul.f32 %v224, 0.5
    %v275 = vmul.f32 %v265, 0.5
    %v276 = vmul.f32 %v267, 0.5
    %v277 = vtanh.pop %v269
    %v278 = vtanh.pop %v270
    %v279 = vtanh.pop %v271
    %v280 = vtanh.pop %v272
    %v281 = vtanh.pop %v273
    %v282 = vtanh.pop %v274
    %v283 = vtanh.pop %v275
    %v284 = vtanh.pop %v276
    %v285 = vadd.f32 %v277, 1.0
    %v286 = vadd.f32 %v278, 1.0
    %v287 = vadd.f32 %v279, 1.0
    %v288 = vadd.f32 %v280, 1.0
    %v289 = vadd.f32 %v281, 1.0
    %v290 = vadd.f32 %v282, 1.0
    %v291 = vadd.f32 %v283, 1.0
    %v292 = vadd.f32 %v284, 1.0
    %v293 = vmul.f32 %v269, %v285
    %v294 = vmul.f32 %v270, %v286
    %v295 = vmul.f32 %v271, %v287
    %v296 = vmul.f32 %v272, %v288
    %v297 = vmul.f32 %v273, %v289
    %v298 = vmul.f32 %v274, %v290
    %v299 = vmul.f32 %v275, %v291
    %v300 = vmul.f32 %v276, %v292
    %v301 = vpack.c.bf16 %v297, %v293
    %v302 = vpack.c.bf16 %v298, %v294
    %v303 = vpack.c.bf16 %v299, %v295
    %v304 = vpack.c.bf16 %v300, %v296
    %v305 = vld [vmem:[#allocation7] sm:$0xff]
    %v306 = vld [vmem:[#allocation7 + $0x8] sm:$0xff]
    %v307 = vld [vmem:[#allocation7 + $0x10] sm:$0xff]
    %v308 = vld [vmem:[#allocation7 + $0x18] sm:$0xff]
    %v309 = vld [vmem:[#allocation7 + $0x20] sm:$0xff]
    %v310 = vld [vmem:[#allocation7 + $0x28] sm:$0xff]
    %v311 = vld [vmem:[#allocation7 + $0x30] sm:$0xff]
    %v312 = vld [vmem:[#allocation7 + $0x38] sm:$0xff]
    %v313 = vld [vmem:[#allocation7 + $0x40] sm:$0xff]
    %v314 = vld [vmem:[#allocation7 + $0x48] sm:$0xff]
    %v315 = vld [vmem:[#allocation7 + $0x50] sm:$0xff]
    %v316 = vld [vmem:[#allocation7 + $0x58] sm:$0xff]
    %v317 = vld [vmem:[#allocation7 + $0x60] sm:$0xff]
    %v318 = vld [vmem:[#allocation7 + $0x68] sm:$0xff]
    %v319 = vld [vmem:[#allocation7 + $0x70] sm:$0xff]
    %v320 = vld [vmem:[#allocation7 + $0x78] sm:$0xff]
    %v321 = vld [vmem:[#allocation7 + $0x80] sm:$0xff]
    %v322 = vld [vmem:[#allocation7 + $0x88] sm:$0xff]
    %v323 = vld [vmem:[#allocation7 + $0x90] sm:$0xff]
    %v324 = vld [vmem:[#allocation7 + $0x98] sm:$0xff]
    %v325 = vld [vmem:[#allocation7 + $0xa0] sm:$0xff]
    %v326 = vld [vmem:[#allocation7 + $0xa8] sm:$0xff]
    %v327 = vld [vmem:[#allocation7 + $0xb0] sm:$0xff]
    %v328 = vld [vmem:[#allocation7 + $0xb8] sm:$0xff]
    %v329 = vld [vmem:[#allocation7 + $0xc0] sm:$0xff]
    %v330 = vld [vmem:[#allocation7 + $0xc8] sm:$0xff]
    %v331 = vld [vmem:[#allocation7 + $0xd0] sm:$0xff]
    %v332 = vld [vmem:[#allocation7 + $0xd8] sm:$0xff]
    %v333 = vld [vmem:[#allocation7 + $0xe0] sm:$0xff]
    %v334 = vld [vmem:[#allocation7 + $0xe8] sm:$0xff]
    %v335 = vld [vmem:[#allocation7 + $0xf0] sm:$0xff]
    %v336 = vld [vmem:[#allocation7 + $0xf8] sm:$0xff]
    %v337 = vld [vmem:[#allocation7 + $0x100] sm:$0xff]
    %v338 = vld [vmem:[#allocation7 + $0x108] sm:$0xff]
    %v339 = vld [vmem:[#allocation7 + $0x110] sm:$0xff]
    %v340 = vld [vmem:[#allocation7 + $0x118] sm:$0xff]
    %v341 = vld [vmem:[#allocation7 + $0x120] sm:$0xff]
    %v342 = vld [vmem:[#allocation7 + $0x128] sm:$0xff]
    %v343 = vld [vmem:[#allocation7 + $0x130] sm:$0xff]
    %v344 = vld [vmem:[#allocation7 + $0x138] sm:$0xff]
    %v345 = vld [vmem:[#allocation7 + $0x140] sm:$0xff]
    %v346 = vld [vmem:[#allocation7 + $0x148] sm:$0xff]
    %v347 = vld [vmem:[#allocation7 + $0x150] sm:$0xff]
    %v348 = vld [vmem:[#allocation7 + $0x158] sm:$0xff]
    %v349 = vld [vmem:[#allocation7 + $0x160] sm:$0xff]
    %v350 = vld [vmem:[#allocation7 + $0x168] sm:$0xff]
    %v351 = vld [vmem:[#allocation7 + $0x170] sm:$0xff]
    %v352 = vld [vmem:[#allocation7 + $0x178] sm:$0xff]
    %v353 = vld [vmem:[#allocation7 + $0x180] sm:$0xff]
    %v354 = vld [vmem:[#allocation7 + $0x188] sm:$0xff]
    %v355 = vld [vmem:[#allocation7 + $0x190] sm:$0xff]
    %v356 = vld [vmem:[#allocation7 + $0x198] sm:$0xff]
    %v357 = vld [vmem:[#allocation7 + $0x1a0] sm:$0xff]
    %v358 = vld [vmem:[#allocation7 + $0x1a8] sm:$0xff]
    %v359 = vld [vmem:[#allocation7 + $0x1b0] sm:$0xff]
    %v360 = vld [vmem:[#allocation7 + $0x1b8] sm:$0xff]
    %v361 = vld [vmem:[#allocation7 + $0x1c0] sm:$0xff]
    %v362 = vld [vmem:[#allocation7 + $0x1c8] sm:$0xff]
    %v363 = vld [vmem:[#allocation7 + $0x1d0] sm:$0xff]
    %v364 = vld [vmem:[#allocation7 + $0x1d8] sm:$0xff]
    %v365 = vld [vmem:[#allocation7 + $0x1e0] sm:$0xff]
    %v366 = vld [vmem:[#allocation7 + $0x1e8] sm:$0xff]
    %v367 = vld [vmem:[#allocation7 + $0x1f0] sm:$0xff]
    %v368 = vld [vmem:[#allocation7 + $0x1f8] sm:$0xff]
    %v369 = vld [vmem:[#allocation7 + $0x200] sm:$0xff]
    %v370 = vld [vmem:[#allocation7 + $0x208] sm:$0xff]
    %v371 = vld [vmem:[#allocation7 + $0x210] sm:$0xff]
    %v372 = vld [vmem:[#allocation7 + $0x218] sm:$0xff]
    %v373 = vld [vmem:[#allocation7 + $0x220] sm:$0xff]
    %v374 = vld [vmem:[#allocation7 + $0x228] sm:$0xff]
    %v375 = vld [vmem:[#allocation7 + $0x230] sm:$0xff]
    %v376 = vld [vmem:[#allocation7 + $0x238] sm:$0xff]
    %v377 = vld [vmem:[#allocation7 + $0x240] sm:$0xff]
    %v378 = vld [vmem:[#allocation7 + $0x248] sm:$0xff]
    %v379 = vld [vmem:[#allocation7 + $0x250] sm:$0xff]
    %v380 = vld [vmem:[#allocation7 + $0x258] sm:$0xff]
    %v381 = vld [vmem:[#allocation7 + $0x260] sm:$0xff]
    %v382 = vld [vmem:[#allocation7 + $0x268] sm:$0xff]
    %v383 = vld [vmem:[#allocation7 + $0x270] sm:$0xff]
    %v384 = vld [vmem:[#allocation7 + $0x278] sm:$0xff]
    %v385 = vld [vmem:[#allocation7 + $0x280] sm:$0xff]
    %v386 = vld [vmem:[#allocation7 + $0x288] sm:$0xff]
    %v387 = vld [vmem:[#allocation7 + $0x290] sm:$0xff]
    %v388 = vld [vmem:[#allocation7 + $0x298] sm:$0xff]
    %v389 = vld [vmem:[#allocation7 + $0x2a0] sm:$0xff]
    %v390 = vld [vmem:[#allocation7 + $0x2a8] sm:$0xff]
    %v391 = vld [vmem:[#allocation7 + $0x2b0] sm:$0xff]
    %v392 = vld [vmem:[#allocation7 + $0x2b8] sm:$0xff]
    %v393 = vld [vmem:[#allocation7 + $0x2c0] sm:$0xff]
    %v394 = vld [vmem:[#allocation7 + $0x2c8] sm:$0xff]
    %v395 = vld [vmem:[#allocation7 + $0x2d0] sm:$0xff]
    %v396 = vld [vmem:[#allocation7 + $0x2d8] sm:$0xff]
    %v397 = vld [vmem:[#allocation7 + $0x2e0] sm:$0xff]
    %v398 = vld [vmem:[#allocation7 + $0x2e8] sm:$0xff]
    %v399 = vld [vmem:[#allocation7 + $0x2f0] sm:$0xff]
    %v400 = vld [vmem:[#allocation7 + $0x2f8] sm:$0xff]
    %v401 = vld [vmem:[#allocation7 + $0x300] sm:$0xff]
    %v402 = vld [vmem:[#allocation7 + $0x308] sm:$0xff]
    %v403 = vld [vmem:[#allocation7 + $0x310] sm:$0xff]
    %v404 = vld [vmem:[#allocation7 + $0x318] sm:$0xff]
    %v405 = vld [vmem:[#allocation7 + $0x320] sm:$0xff]
    %v406 = vld [vmem:[#allocation7 + $0x328] sm:$0xff]
    %v407 = vld [vmem:[#allocation7 + $0x330] sm:$0xff]
    %v408 = vld [vmem:[#allocation7 + $0x338] sm:$0xff]
    %v409 = vld [vmem:[#allocation7 + $0x340] sm:$0xff]
    %v410 = vld [vmem:[#allocation7 + $0x348] sm:$0xff]
    %v411 = vld [vmem:[#allocation7 + $0x350] sm:$0xff]
    %v412 = vld [vmem:[#allocation7 + $0x358] sm:$0xff]
    %v413 = vld [vmem:[#allocation7 + $0x360] sm:$0xff]
    %v414 = vld [vmem:[#allocation7 + $0x368] sm:$0xff]
    %v415 = vld [vmem:[#allocation7 + $0x370] sm:$0xff]
    %v416 = vld [vmem:[#allocation7 + $0x378] sm:$0xff]
    %v417 = vld [vmem:[#allocation7 + $0x380] sm:$0xff]
    %v418 = vld [vmem:[#allocation7 + $0x388] sm:$0xff]
    %v419 = vld [vmem:[#allocation7 + $0x390] sm:$0xff]
    %v420 = vld [vmem:[#allocation7 + $0x398] sm:$0xff]
    %v421 = vld [vmem:[#allocation7 + $0x3a0] sm:$0xff]
    %v422 = vld [vmem:[#allocation7 + $0x3a8] sm:$0xff]
    %v423 = vld [vmem:[#allocation7 + $0x3b0] sm:$0xff]
    %v424 = vld [vmem:[#allocation7 + $0x3b8] sm:$0xff]
    %v425 = vld [vmem:[#allocation7 + $0x3c0] sm:$0xff]
    %v426 = vld [vmem:[#allocation7 + $0x3c8] sm:$0xff]
    %v427 = vld [vmem:[#allocation7 + $0x3d0] sm:$0xff]
    %v428 = vld [vmem:[#allocation7 + $0x3d8] sm:$0xff]
    %v429 = vld [vmem:[#allocation7 + $0x3e0] sm:$0xff]
    %v430 = vld [vmem:[#allocation7 + $0x3e8] sm:$0xff]
    %v431 = vld [vmem:[#allocation7 + $0x3f0] sm:$0xff]
    %v432 = vld [vmem:[#allocation7 + $0x3f8] sm:$0xff]
    %v433 = vld [vmem:[%s4] sm:$0xf]
    %v435 = vlaneseq
    %v436 = vshrl.u32 %v435, 7
    %v437 = vsub.s32 0, %v436
    %v438 = vrot.slane %v433, %v437
    %v439 = vlaneseq
    %v440 = vshrl.u32 %v439, 7
    %v441 = vsub.s32 1, %v440
    %v442 = vrot.slane %v433, %v441
    %v443 = vlaneseq
    %v444 = vshrl.u32 %v443, 7
    %v445 = vsub.s32 2, %v444
    %v446 = vrot.slane %v433, %v445
    %v447 = vlaneseq
    %v448 = vshrl.u32 %v447, 7
    %v449 = vsub.s32 3, %v448
    %v450 = vrot.slane %v433, %v449
    %v583 = vunpack.c.l.b16 %v305
    %v584 = vunpack.c.h.b16 %v305
    %v585 = vunpack.c.l.b16 %v306
    %v586 = vunpack.c.h.b16 %v306
    %v587 = vunpack.c.l.b16 %v307
    %v588 = vunpack.c.h.b16 %v307
    %v589 = vunpack.c.l.b16 %v308
    %v590 = vunpack.c.h.b16 %v308
    %v591 = vunpack.c.l.b16 %v309
    %v592 = vunpack.c.h.b16 %v309
    %v593 = vunpack.c.l.b16 %v310
    %v594 = vunpack.c.h.b16 %v310
    %v595 = vunpack.c.l.b16 %v311
    %v596 = vunpack.c.h.b16 %v311
    %v597 = vunpack.c.l.b16 %v312
    %v598 = vunpack.c.h.b16 %v312
    %v599 = vunpack.c.l.b16 %v313
    %v600 = vunpack.c.h.b16 %v313
    %v601 = vunpack.c.l.b16 %v314
    %v602 = vunpack.c.h.b16 %v314
    %v603 = vunpack.c.l.b16 %v315
    %v604 = vunpack.c.h.b16 %v315
    %v605 = vunpack.c.l.b16 %v316
    %v606 = vunpack.c.h.b16 %v316
    %v607 = vunpack.c.l.b16 %v317
    %v608 = vunpack.c.h.b16 %v317
    %v609 = vunpack.c.l.b16 %v318
    %v610 = vunpack.c.h.b16 %v318
    %v611 = vunpack.c.l.b16 %v319
    %v612 = vunpack.c.h.b16 %v319
    %v613 = vunpack.c.l.b16 %v320
    %v614 = vunpack.c.h.b16 %v320
    %v615 = vunpack.c.l.b16 %v321
    %v616 = vunpack.c.h.b16 %v321
    %v617 = vunpack.c.l.b16 %v322
    %v618 = vunpack.c.h.b16 %v322
    %v619 = vunpack.c.l.b16 %v323
    %v620 = vunpack.c.h.b16 %v323
    %v621 = vunpack.c.l.b16 %v324
    %v622 = vunpack.c.h.b16 %v324
    %v623 = vunpack.c.l.b16 %v325
    %v624 = vunpack.c.h.b16 %v325
    %v625 = vunpack.c.l.b16 %v326
    %v626 = vunpack.c.h.b16 %v326
    %v627 = vunpack.c.l.b16 %v327
    %v628 = vunpack.c.h.b16 %v327
    %v629 = vunpack.c.l.b16 %v328
    %v630 = vunpack.c.h.b16 %v328
    %v631 = vunpack.c.l.b16 %v329
    %v632 = vunpack.c.h.b16 %v329
    %v633 = vunpack.c.l.b16 %v330
    %v634 = vunpack.c.h.b16 %v330
    %v635 = vunpack.c.l.b16 %v331
    %v636 = vunpack.c.h.b16 %v331
    %v637 = vunpack.c.l.b16 %v332
    %v638 = vunpack.c.h.b16 %v332
    %v639 = vunpack.c.l.b16 %v333
    %v640 = vunpack.c.h.b16 %v333
    %v641 = vunpack.c.l.b16 %v334
    %v642 = vunpack.c.h.b16 %v334
    %v643 = vunpack.c.l.b16 %v335
    %v644 = vunpack.c.h.b16 %v335
    %v645 = vunpack.c.l.b16 %v336
    %v646 = vunpack.c.h.b16 %v336
    %v647 = vunpack.c.l.b16 %v337
    %v648 = vunpack.c.h.b16 %v337
    %v649 = vunpack.c.l.b16 %v338
    %v650 = vunpack.c.h.b16 %v338
    %v651 = vunpack.c.l.b16 %v339
    %v652 = vunpack.c.h.b16 %v339
    %v653 = vunpack.c.l.b16 %v340
    %v654 = vunpack.c.h.b16 %v340
    %v655 = vunpack.c.l.b16 %v341
    %v656 = vunpack.c.h.b16 %v341
    %v657 = vunpack.c.l.b16 %v342
    %v658 = vunpack.c.h.b16 %v342
    %v659 = vunpack.c.l.b16 %v343
    %v660 = vunpack.c.h.b16 %v343
    %v661 = vunpack.c.l.b16 %v344
    %v662 = vunpack.c.h.b16 %v344
    %v663 = vunpack.c.l.b16 %v345
    %v664 = vunpack.c.h.b16 %v345
    %v665 = vunpack.c.l.b16 %v346
    %v666 = vunpack.c.h.b16 %v346
    %v667 = vunpack.c.l.b16 %v347
    %v668 = vunpack.c.h.b16 %v347
    %v669 = vunpack.c.l.b16 %v348
    %v670 = vunpack.c.h.b16 %v348
    %v671 = vunpack.c.l.b16 %v349
    %v672 = vunpack.c.h.b16 %v349
    %v673 = vunpack.c.l.b16 %v350
    %v674 = vunpack.c.h.b16 %v350
    %v675 = vunpack.c.l.b16 %v351
    %v676 = vunpack.c.h.b16 %v351
    %v677 = vunpack.c.l.b16 %v352
    %v678 = vunpack.c.h.b16 %v352
    %v679 = vunpack.c.l.b16 %v353
    %v680 = vunpack.c.h.b16 %v353
    %v681 = vunpack.c.l.b16 %v354
    %v682 = vunpack.c.h.b16 %v354
    %v683 = vunpack.c.l.b16 %v355
    %v684 = vunpack.c.h.b16 %v355
    %v685 = vunpack.c.l.b16 %v356
    %v686 = vunpack.c.h.b16 %v356
    %v687 = vunpack.c.l.b16 %v357
    %v688 = vunpack.c.h.b16 %v357
    %v689 = vunpack.c.l.b16 %v358
    %v690 = vunpack.c.h.b16 %v358
    %v691 = vunpack.c.l.b16 %v359
    %v692 = vunpack.c.h.b16 %v359
    %v693 = vunpack.c.l.b16 %v360
    %v694 = vunpack.c.h.b16 %v360
    %v695 = vunpack.c.l.b16 %v361
    %v696 = vunpack.c.h.b16 %v361
    %v697 = vunpack.c.l.b16 %v362
    %v698 = vunpack.c.h.b16 %v362
    %v699 = vunpack.c.l.b16 %v363
    %v700 = vunpack.c.h.b16 %v363
    %v701 = vunpack.c.l.b16 %v364
    %v702 = vunpack.c.h.b16 %v364
    %v703 = vunpack.c.l.b16 %v365
    %v704 = vunpack.c.h.b16 %v365
    %v705 = vunpack.c.l.b16 %v366
    %v706 = vunpack.c.h.b16 %v366
    %v707 = vunpack.c.l.b16 %v367
    %v708 = vunpack.c.h.b16 %v367
    %v709 = vunpack.c.l.b16 %v368
    %v710 = vunpack.c.h.b16 %v368
    %v711 = vunpack.c.l.b16 %v369
    %v712 = vunpack.c.h.b16 %v369
    %v713 = vunpack.c.l.b16 %v370
    %v714 = vunpack.c.h.b16 %v370
    %v715 = vunpack.c.l.b16 %v371
    %v716 = vunpack.c.h.b16 %v371
    %v717 = vunpack.c.l.b16 %v372
    %v718 = vunpack.c.h.b16 %v372
    %v719 = vunpack.c.l.b16 %v373
    %v720 = vunpack.c.h.b16 %v373
    %v721 = vunpack.c.l.b16 %v374
    %v722 = vunpack.c.h.b16 %v374
    %v723 = vunpack.c.l.b16 %v375
    %v724 = vunpack.c.h.b16 %v375
    %v725 = vunpack.c.l.b16 %v376
    %v726 = vunpack.c.h.b16 %v376
    %v727 = vunpack.c.l.b16 %v377
    %v728 = vunpack.c.h.b16 %v377
    %v729 = vunpack.c.l.b16 %v378
    %v730 = vunpack.c.h.b16 %v378
    %v731 = vunpack.c.l.b16 %v379
    %v732 = vunpack.c.h.b16 %v379
    %v733 = vunpack.c.l.b16 %v380
    %v734 = vunpack.c.h.b16 %v380
    %v735 = vunpack.c.l.b16 %v381
    %v736 = vunpack.c.h.b16 %v381
    %v737 = vunpack.c.l.b16 %v382
    %v738 = vunpack.c.h.b16 %v382
    %v739 = vunpack.c.l.b16 %v383
    %v740 = vunpack.c.h.b16 %v383
    %v741 = vunpack.c.l.b16 %v384
    %v742 = vunpack.c.h.b16 %v384
    %v743 = vunpack.c.l.b16 %v385
    %v744 = vunpack.c.h.b16 %v385
    %v745 = vunpack.c.l.b16 %v386
    %v746 = vunpack.c.h.b16 %v386
    %v747 = vunpack.c.l.b16 %v387
    %v748 = vunpack.c.h.b16 %v387
    %v749 = vunpack.c.l.b16 %v388
    %v750 = vunpack.c.h.b16 %v388
    %v751 = vunpack.c.l.b16 %v389
    %v752 = vunpack.c.h.b16 %v389
    %v753 = vunpack.c.l.b16 %v390
    %v754 = vunpack.c.h.b16 %v390
    %v755 = vunpack.c.l.b16 %v391
    %v756 = vunpack.c.h.b16 %v391
    %v757 = vunpack.c.l.b16 %v392
    %v758 = vunpack.c.h.b16 %v392
    %v759 = vunpack.c.l.b16 %v393
    %v760 = vunpack.c.h.b16 %v393
    %v761 = vunpack.c.l.b16 %v394
    %v762 = vunpack.c.h.b16 %v394
    %v763 = vunpack.c.l.b16 %v395
    %v764 = vunpack.c.h.b16 %v395
    %v765 = vunpack.c.l.b16 %v396
    %v766 = vunpack.c.h.b16 %v396
    %v767 = vunpack.c.l.b16 %v397
    %v768 = vunpack.c.h.b16 %v397
    %v769 = vunpack.c.l.b16 %v398
    %v770 = vunpack.c.h.b16 %v398
    %v771 = vunpack.c.l.b16 %v399
    %v772 = vunpack.c.h.b16 %v399
    %v773 = vunpack.c.l.b16 %v400
    %v774 = vunpack.c.h.b16 %v400
    %v775 = vunpack.c.l.b16 %v401
    %v776 = vunpack.c.h.b16 %v401
    %v777 = vunpack.c.l.b16 %v402
    %v778 = vunpack.c.h.b16 %v402
    %v779 = vunpack.c.l.b16 %v403
    %v780 = vunpack.c.h.b16 %v403
    %v781 = vunpack.c.l.b16 %v404
    %v782 = vunpack.c.h.b16 %v404
    %v783 = vunpack.c.l.b16 %v405
    %v784 = vunpack.c.h.b16 %v405
    %v785 = vunpack.c.l.b16 %v406
    %v786 = vunpack.c.h.b16 %v406
    %v787 = vunpack.c.l.b16 %v407
    %v788 = vunpack.c.h.b16 %v407
    %v789 = vunpack.c.l.b16 %v408
    %v790 = vunpack.c.h.b16 %v408
    %v791 = vunpack.c.l.b16 %v409
    %v792 = vunpack.c.h.b16 %v409
    %v793 = vunpack.c.l.b16 %v410
    %v794 = vunpack.c.h.b16 %v410
    %v795 = vunpack.c.l.b16 %v411
    %v796 = vunpack.c.h.b16 %v411
    %v797 = vunpack.c.l.b16 %v412
    %v798 = vunpack.c.h.b16 %v412
    %v799 = vunpack.c.l.b16 %v413
    %v800 = vunpack.c.h.b16 %v413
    %v801 = vunpack.c.l.b16 %v414
    %v802 = vunpack.c.h.b16 %v414
    %v803 = vunpack.c.l.b16 %v415
    %v804 = vunpack.c.h.b16 %v415
    %v805 = vunpack.c.l.b16 %v416
    %v806 = vunpack.c.h.b16 %v416
    %v807 = vunpack.c.l.b16 %v417
    %v808 = vunpack.c.h.b16 %v417
    %v809 = vunpack.c.l.b16 %v418
    %v810 = vunpack.c.h.b16 %v418
    %v811 = vunpack.c.l.b16 %v419
    %v812 = vunpack.c.h.b16 %v419
    %v813 = vunpack.c.l.b16 %v420
    %v814 = vunpack.c.h.b16 %v420
    %v815 = vunpack.c.l.b16 %v421
    %v816 = vunpack.c.h.b16 %v421
    %v817 = vunpack.c.l.b16 %v422
    %v818 = vunpack.c.h.b16 %v422
    %v819 = vunpack.c.l.b16 %v423
    %v820 = vunpack.c.h.b16 %v423
    %v821 = vunpack.c.l.b16 %v424
    %v822 = vunpack.c.h.b16 %v424
    %v823 = vunpack.c.l.b16 %v425
    %v824 = vunpack.c.h.b16 %v425
    %v825 = vunpack.c.l.b16 %v426
    %v826 = vunpack.c.h.b16 %v426
    %v827 = vunpack.c.l.b16 %v427
    %v828 = vunpack.c.h.b16 %v427
    %v829 = vunpack.c.l.b16 %v428
    %v830 = vunpack.c.h.b16 %v428
    %v831 = vunpack.c.l.b16 %v429
    %v832 = vunpack.c.h.b16 %v429
    %v833 = vunpack.c.l.b16 %v430
    %v834 = vunpack.c.h.b16 %v430
    %v835 = vunpack.c.l.b16 %v431
    %v836 = vunpack.c.h.b16 %v431
    %v837 = vunpack.c.l.b16 %v432
    %v838 = vunpack.c.h.b16 %v432
    %v839 = vpack.c.b16 %v587, %v583
    %v840 = vpack.c.b16 %v588, %v584
    %v841 = vpack.c.b16 %v589, %v585
    %v842 = vpack.c.b16 %v590, %v586
    %v843 = vpack.c.b16 %v595, %v591
    %v844 = vpack.c.b16 %v596, %v592
    %v845 = vpack.c.b16 %v597, %v593
    %v846 = vpack.c.b16 %v598, %v594
    %v847 = vpack.c.b16 %v603, %v599
    %v848 = vpack.c.b16 %v604, %v600
    %v849 = vpack.c.b16 %v605, %v601
    %v850 = vpack.c.b16 %v606, %v602
    %v851 = vpack.c.b16 %v611, %v607
    %v852 = vpack.c.b16 %v612, %v608
    %v853 = vpack.c.b16 %v613, %v609
    %v854 = vpack.c.b16 %v614, %v610
    %v855 = vpack.c.b16 %v619, %v615
    %v856 = vpack.c.b16 %v620, %v616
    %v857 = vpack.c.b16 %v621, %v617
    %v858 = vpack.c.b16 %v622, %v618
    %v859 = vpack.c.b16 %v627, %v623
    %v860 = vpack.c.b16 %v628, %v624
    %v861 = vpack.c.b16 %v629, %v625
    %v862 = vpack.c.b16 %v630, %v626
    %v863 = vpack.c.b16 %v635, %v631
    %v864 = vpack.c.b16 %v636, %v632
    %v865 = vpack.c.b16 %v637, %v633
    %v866 = vpack.c.b16 %v638, %v634
    %v867 = vpack.c.b16 %v643, %v639
    %v868 = vpack.c.b16 %v644, %v640
    %v869 = vpack.c.b16 %v645, %v641
    %v870 = vpack.c.b16 %v646, %v642
    %v871 = vpack.c.b16 %v651, %v647
    %v872 = vpack.c.b16 %v652, %v648
    %v873 = vpack.c.b16 %v653, %v649
    %v874 = vpack.c.b16 %v654, %v650
    %v875 = vpack.c.b16 %v659, %v655
    %v876 = vpack.c.b16 %v660, %v656
    %v877 = vpack.c.b16 %v661, %v657
    %v878 = vpack.c.b16 %v662, %v658
    %v879 = vpack.c.b16 %v667, %v663
    %v880 = vpack.c.b16 %v668, %v664
    %v881 = vpack.c.b16 %v669, %v665
    %v882 = vpack.c.b16 %v670, %v666
    %v883 = vpack.c.b16 %v675, %v671
    %v884 = vpack.c.b16 %v676, %v672
    %v885 = vpack.c.b16 %v677, %v673
    %v886 = vpack.c.b16 %v678, %v674
    %v887 = vpack.c.b16 %v683, %v679
    %v888 = vpack.c.b16 %v684, %v680
    %v889 = vpack.c.b16 %v685, %v681
    %v890 = vpack.c.b16 %v686, %v682
    %v891 = vpack.c.b16 %v691, %v687
    %v892 = vpack.c.b16 %v692, %v688
    %v893 = vpack.c.b16 %v693, %v689
    %v894 = vpack.c.b16 %v694, %v690
    %v895 = vpack.c.b16 %v699, %v695
    %v896 = vpack.c.b16 %v700, %v696
    %v897 = vpack.c.b16 %v701, %v697
    %v898 = vpack.c.b16 %v702, %v698
    %v899 = vpack.c.b16 %v707, %v703
    %v900 = vpack.c.b16 %v708, %v704
    %v901 = vpack.c.b16 %v709, %v705
    %v902 = vpack.c.b16 %v710, %v706
    %v903 = vpack.c.b16 %v715, %v711
    %v904 = vpack.c.b16 %v716, %v712
    %v905 = vpack.c.b16 %v717, %v713
    %v906 = vpack.c.b16 %v718, %v714
    %v907 = vpack.c.b16 %v723, %v719
    %v908 = vpack.c.b16 %v724, %v720
    %v909 = vpack.c.b16 %v725, %v721
    %v910 = vpack.c.b16 %v726, %v722
    %v911 = vpack.c.b16 %v731, %v727
    %v912 = vpack.c.b16 %v732, %v728
    %v913 = vpack.c.b16 %v733, %v729
    %v914 = vpack.c.b16 %v734, %v730
    %v915 = vpack.c.b16 %v739, %v735
    %v916 = vpack.c.b16 %v740, %v736
    %v917 = vpack.c.b16 %v741, %v737
    %v918 = vpack.c.b16 %v742, %v738
    %v919 = vpack.c.b16 %v747, %v743
    %v920 = vpack.c.b16 %v748, %v744
    %v921 = vpack.c.b16 %v749, %v745
    %v922 = vpack.c.b16 %v750, %v746
    %v923 = vpack.c.b16 %v755, %v751
    %v924 = vpack.c.b16 %v756, %v752
    %v925 = vpack.c.b16 %v757, %v753
    %v926 = vpack.c.b16 %v758, %v754
    %v927 = vpack.c.b16 %v763, %v759
    %v928 = vpack.c.b16 %v764, %v760
    %v929 = vpack.c.b16 %v765, %v761
    %v930 = vpack.c.b16 %v766, %v762
    %v931 = vpack.c.b16 %v771, %v767
    %v932 = vpack.c.b16 %v772, %v768
    %v933 = vpack.c.b16 %v773, %v769
    %v934 = vpack.c.b16 %v774, %v770
    %v935 = vpack.c.b16 %v779, %v775
    %v936 = vpack.c.b16 %v780, %v776
    %v937 = vpack.c.b16 %v781, %v777
    %v938 = vpack.c.b16 %v782, %v778
    %v939 = vpack.c.b16 %v787, %v783
    %v940 = vpack.c.b16 %v788, %v784
    %v941 = vpack.c.b16 %v789, %v785
    %v942 = vpack.c.b16 %v790, %v786
    %v943 = vpack.c.b16 %v795, %v791
    %v944 = vpack.c.b16 %v796, %v792
    %v945 = vpack.c.b16 %v797, %v793
    %v946 = vpack.c.b16 %v798, %v794
    %v947 = vpack.c.b16 %v803, %v799
    %v948 = vpack.c.b16 %v804, %v800
    %v949 = vpack.c.b16 %v805, %v801
    %v950 = vpack.c.b16 %v806, %v802
    %v951 = vpack.c.b16 %v811, %v807
    %v952 = vpack.c.b16 %v812, %v808
    %v953 = vpack.c.b16 %v813, %v809
    %v954 = vpack.c.b16 %v814, %v810
    %v955 = vpack.c.b16 %v819, %v815
    %v956 = vpack.c.b16 %v820, %v816
    %v957 = vpack.c.b16 %v821, %v817
    %v958 = vpack.c.b16 %v822, %v818
    %v959 = vpack.c.b16 %v827, %v823
    %v960 = vpack.c.b16 %v828, %v824
    %v961 = vpack.c.b16 %v829, %v825
    %v962 = vpack.c.b16 %v830, %v826
    %v963 = vpack.c.b16 %v835, %v831
    %v964 = vpack.c.b16 %v836, %v832
    %v965 = vpack.c.b16 %v837, %v833
    %v966 = vpack.c.b16 %v838, %v834
    %1095 = vmatprep.subr.bf16.mxu0 %v840
    %1096 = vmatpush1.bf16.msra.mxu0 %v839
    %1097 = vmatprep.subr.bf16.mxu0 %v844
    %1098 = vmatpush1.bf16.msra.mxu0 %v843
    %1099 = vmatprep.subr.bf16.mxu0 %v848
    %1100 = vmatpush1.bf16.msra.mxu0 %v847
    %1101 = vmatprep.subr.bf16.mxu0 %v852
    %1102 = vmatpush1.bf16.msra.mxu0 %v851
    %1103 = vmatprep.subr.bf16.mxu0 %v856
    %1104 = vmatpush1.bf16.msra.mxu0 %v855
    %1105 = vmatprep.subr.bf16.mxu0 %v860
    %1106 = vmatpush1.bf16.msra.mxu0 %v859
    %1107 = vmatprep.subr.bf16.mxu0 %v864
    %1108 = vmatpush1.bf16.msra.mxu0 %v863
    %1109 = vmatprep.subr.bf16.mxu0 %v868
    %1110 = vmatpush1.bf16.msra.mxu0 %v867
    %1111 = vmatprep.subr.bf16.mxu0 %v872
    %1112 = vmatpush1.bf16.msra.mxu0 %v871
    %1113 = vmatprep.subr.bf16.mxu0 %v876
    %1114 = vmatpush1.bf16.msra.mxu0 %v875
    %1115 = vmatprep.subr.bf16.mxu0 %v880
    %1116 = vmatpush1.bf16.msra.mxu0 %v879
    %1117 = vmatprep.subr.bf16.mxu0 %v884
    %1118 = vmatpush1.bf16.msra.mxu0 %v883
    %1119 = vmatprep.subr.bf16.mxu0 %v888
    %1120 = vmatpush1.bf16.msra.mxu0 %v887
    %1121 = vmatprep.subr.bf16.mxu0 %v892
    %1122 = vmatpush1.bf16.msra.mxu0 %v891
    %1123 = vmatprep.subr.bf16.mxu0 %v896
    %1124 = vmatpush1.bf16.msra.mxu0 %v895
    %1125 = vmatprep.subr.bf16.mxu0 %v900
    %1126 = vmatpush1.bf16.msra.mxu0 %v899
    %1127 = vmatprep.mubr.bf16.mxu0 %v302
    %1128 = vmatmul.mubr.bf16.gmra.mrb[0].mxu0 %v301
    %v1129 = vpop.f32.mrb[0].mxu0
    %v1130 = vadd.f32 %v438, %v1129
    %v1131 = vpop.f32.mrb[0].mxu0
    %v1132 = vadd.f32 %v442, %v1131
    %v1133 = vpop.f32.mrb[0].mxu0
    %v1134 = vadd.f32 %v438, %v1133
    %v1135 = vpop.f32.mrb[0].mxu0
    %v1136 = vadd.f32 %v442, %v1135
    %1137 = vdwg.mxu0
    %1138 = vmatprep.subr.bf16.mxu0 %v904
    %1139 = vmatpush1.bf16.msra.mxu0 %v903
    %1140 = vmatprep.subr.bf16.mxu0 %v908
    %1141 = vmatpush1.bf16.msra.mxu0 %v907
    %1142 = vmatprep.subr.bf16.mxu0 %v912
    %1143 = vmatpush1.bf16.msra.mxu0 %v911
    %1144 = vmatprep.subr.bf16.mxu0 %v916
    %1145 = vmatpush1.bf16.msra.mxu0 %v915
    %1146 = vmatprep.subr.bf16.mxu0 %v920
    %1147 = vmatpush1.bf16.msra.mxu0 %v919
    %1148 = vmatprep.subr.bf16.mxu0 %v924
    %1149 = vmatpush1.bf16.msra.mxu0 %v923
    %1150 = vmatprep.subr.bf16.mxu0 %v928
    %1151 = vmatpush1.bf16.msra.mxu0 %v927
    %1152 = vmatprep.subr.bf16.mxu0 %v932
    %1153 = vmatpush1.bf16.msra.mxu0 %v931
    %1154 = vmatprep.subr.bf16.mxu0 %v936
    %1155 = vmatpush1.bf16.msra.mxu0 %v935
    %1156 = vmatprep.subr.bf16.mxu0 %v940
    %1157 = vmatpush1.bf16.msra.mxu0 %v939
    %1158 = vmatprep.subr.bf16.mxu0 %v944
    %1159 = vmatpush1.bf16.msra.mxu0 %v943
    %1160 = vmatprep.subr.bf16.mxu0 %v948
    %1161 = vmatpush1.bf16.msra.mxu0 %v947
    %1162 = vmatprep.subr.bf16.mxu0 %v952
    %1163 = vmatpush1.bf16.msra.mxu0 %v951
    %1164 = vmatprep.subr.bf16.mxu0 %v956
    %1165 = vmatpush1.bf16.msra.mxu0 %v955
    %1166 = vmatprep.subr.bf16.mxu0 %v960
    %1167 = vmatpush1.bf16.msra.mxu0 %v959
    %1168 = vmatprep.subr.bf16.mxu0 %v964
    %1169 = vmatpush1.bf16.msra.mxu0 %v963
    %1170 = vmatprep.mubr.bf16.mxu0 %v304
    %1171 = vmatmul.mubr.bf16.gmra.mrb[0].mxu0 %v303
    %v1172 = vpop.f32.mrb[0].mxu0
    %v1173 = vadd.f32 %v1130, %v1172
    %v1174 = vpop.f32.mrb[0].mxu0
    %v1175 = vadd.f32 %v1132, %v1174
    %v1176 = vpop.f32.mrb[0].mxu0
    %v1177 = vadd.f32 %v1134, %v1176
    %v1178 = vpop.f32.mrb[0].mxu0
    %v1179 = vadd.f32 %v1136, %v1178
    %1180 = vdwg.mxu0
    %1181 = vmatprep.subr.bf16.mxu0 %v842
    %1182 = vmatpush1.bf16.msra.mxu0 %v841
    %1183 = vmatprep.subr.bf16.mxu0 %v846
    %1184 = vmatpush1.bf16.msra.mxu0 %v845
    %1185 = vmatprep.subr.bf16.mxu0 %v850
    %1186 = vmatpush1.bf16.msra.mxu0 %v849
    %1187 = vmatprep.subr.bf16.mxu0 %v854
    %1188 = vmatpush1.bf16.msra.mxu0 %v853
    %1189 = vmatprep.subr.bf16.mxu0 %v858
    %1190 = vmatpush1.bf16.msra.mxu0 %v857
    %1191 = vmatprep.subr.bf16.mxu0 %v862
    %1192 = vmatpush1.bf16.msra.mxu0 %v861
    %1193 = vmatprep.subr.bf16.mxu0 %v866
    %1194 = vmatpush1.bf16.msra.mxu0 %v865
    %1195 = vmatprep.subr.bf16.mxu0 %v870
    %1196 = vmatpush1.bf16.msra.mxu0 %v869
    %1197 = vmatprep.subr.bf16.mxu0 %v874
    %1198 = vmatpush1.bf16.msra.mxu0 %v873
    %1199 = vmatprep.subr.bf16.mxu0 %v878
    %1200 = vmatpush1.bf16.msra.mxu0 %v877
    %1201 = vmatprep.subr.bf16.mxu0 %v882
    %1202 = vmatpush1.bf16.msra.mxu0 %v881
    %1203 = vmatprep.subr.bf16.mxu0 %v886
    %1204 = vmatpush1.bf16.msra.mxu0 %v885
    %1205 = vmatprep.subr.bf16.mxu0 %v890
    %1206 = vmatpush1.bf16.msra.mxu0 %v889
    %1207 = vmatprep.subr.bf16.mxu0 %v894
    %1208 = vmatpush1.bf16.msra.mxu0 %v893
    %1209 = vmatprep.subr.bf16.mxu0 %v898
    %1210 = vmatpush1.bf16.msra.mxu0 %v897
    %1211 = vmatprep.subr.bf16.mxu0 %v902
    %1212 = vmatpush1.bf16.msra.mxu0 %v901
    %1213 = vmatprep.mubr.bf16.mxu0 %v302
    %1214 = vmatmul.mubr.bf16.gmra.mrb[0].mxu0 %v301
    %v1215 = vpop.f32.mrb[0].mxu0
    %v1216 = vadd.f32 %v446, %v1215
    %v1217 = vpop.f32.mrb[0].mxu0
    %v1218 = vadd.f32 %v450, %v1217
    %v1219 = vpop.f32.mrb[0].mxu0
    %v1220 = vadd.f32 %v446, %v1219
    %v1221 = vpop.f32.mrb[0].mxu0
    %v1222 = vadd.f32 %v450, %v1221
    %1223 = vdwg.mxu0
    %1224 = vmatprep.subr.bf16.mxu0 %v906
    %1225 = vmatpush1.bf16.msra.mxu0 %v905
    %1226 = vmatprep.subr.bf16.mxu0 %v910
    %1227 = vmatpush1.bf16.msra.mxu0 %v909
    %1228 = vmatprep.subr.bf16.mxu0 %v914
    %1229 = vmatpush1.bf16.msra.mxu0 %v913
    %1230 = vmatprep.subr.bf16.mxu0 %v918
    %1231 = vmatpush1.bf16.msra.mxu0 %v917
    %1232 = vmatprep.subr.bf16.mxu0 %v922
    %1233 = vmatpush1.bf16.msra.mxu0 %v921
    %1234 = vmatprep.subr.bf16.mxu0 %v926
    %1235 = vmatpush1.bf16.msra.mxu0 %v925
    %1236 = vmatprep.subr.bf16.mxu0 %v930
    %1237 = vmatpush1.bf16.msra.mxu0 %v929
    %1238 = vmatprep.subr.bf16.mxu0 %v934
    %1239 = vmatpush1.bf16.msra.mxu0 %v933
    %1240 = vmatprep.subr.bf16.mxu0 %v938
    %1241 = vmatpush1.bf16.msra.mxu0 %v937
    %1242 = vmatprep.subr.bf16.mxu0 %v942
    %1243 = vmatpush1.bf16.msra.mxu0 %v941
    %1244 = vmatprep.subr.bf16.mxu0 %v946
    %1245 = vmatpush1.bf16.msra.mxu0 %v945
    %1246 = vmatprep.subr.bf16.mxu0 %v950
    %1247 = vmatpush1.bf16.msra.mxu0 %v949
    %1248 = vmatprep.subr.bf16.mxu0 %v954
    %1249 = vmatpush1.bf16.msra.mxu0 %v953
    %1250 = vmatprep.subr.bf16.mxu0 %v958
    %1251 = vmatpush1.bf16.msra.mxu0 %v957
    %1252 = vmatprep.subr.bf16.mxu0 %v962
    %1253 = vmatpush1.bf16.msra.mxu0 %v961
    %1254 = vmatprep.subr.bf16.mxu0 %v966
    %1255 = vmatpush1.bf16.msra.mxu0 %v965
    %1256 = vmatprep.mubr.bf16.mxu0 %v304
    %1257 = vmatmul.mubr.bf16.gmra.mrb[0].mxu0 %v303
    %v1258 = vpop.f32.mrb[0].mxu0
    %v1259 = vadd.f32 %v1216, %v1258
    %v1260 = vpop.f32.mrb[0].mxu0
    %v1261 = vadd.f32 %v1218, %v1260
    %v1262 = vpop.f32.mrb[0].mxu0
    %v1263 = vadd.f32 %v1220, %v1262
    %v1264 = vpop.f32.mrb[0].mxu0
    %v1265 = vadd.f32 %v1222, %v1264
    %1266 = vdwg.mxu0
    %v1267 = vmul.f32 %v1173, 0.5
    %v1268 = vmul.f32 %v1175, 0.5
    %v1269 = vmul.f32 %v1259, 0.5
    %v1270 = vmul.f32 %v1261, 0.5
    %v1271 = vmul.f32 %v1177, 0.5
    %v1272 = vmul.f32 %v1179, 0.5
    %v1273 = vmul.f32 %v1263, 0.5
    %v1274 = vmul.f32 %v1265, 0.5
    %v1275 = vtanh.pop %v1267
    %v1276 = vtanh.pop %v1268
    %v1277 = vtanh.pop %v1269
    %v1278 = vtanh.pop %v1270
    %v1279 = vtanh.pop %v1271
    %v1280 = vtanh.pop %v1272
    %v1281 = vtanh.pop %v1273
    %v1282 = vtanh.pop %v1274
    %v1283 = vadd.f32 %v1275, 1.0
    %v1284 = vadd.f32 %v1276, 1.0
    %v1285 = vadd.f32 %v1277, 1.0
    %v1286 = vadd.f32 %v1278, 1.0
    %v1287 = vadd.f32 %v1279, 1.0
    %v1288 = vadd.f32 %v1280, 1.0
    %v1289 = vadd.f32 %v1281, 1.0
    %v1290 = vadd.f32 %v1282, 1.0
    %v1291 = vmul.f32 %v1267, %v1283
    %v1292 = vmul.f32 %v1268, %v1284
    %v1293 = vmul.f32 %v1269, %v1285
    %v1294 = vmul.f32 %v1270, %v1286
    %v1295 = vmul.f32 %v1271, %v1287
    %v1296 = vmul.f32 %v1272, %v1288
    %v1297 = vmul.f32 %v1273, %v1289
    %v1298 = vmul.f32 %v1274, %v1290
    %v1299 = vpack.c.bf16 %v1295, %v1291
    %v1300 = vpack.c.bf16 %v1296, %v1292
    %v1301 = vpack.c.bf16 %v1297, %v1293
    %v1302 = vpack.c.bf16 %v1298, %v1294
    %v1303 = vld [vmem:[#allocation8] sm:$0xff]
    %v1304 = vld [vmem:[#allocation8 + $0x8] sm:$0xff]
    %v1305 = vld [vmem:[#allocation8 + $0x10] sm:$0xff]
    %v1306 = vld [vmem:[#allocation8 + $0x18] sm:$0xff]
    %v1307 = vld [vmem:[#allocation8 + $0x20] sm:$0xff]
    %v1308 = vld [vmem:[#allocation8 + $0x28] sm:$0xff]
    %v1309 = vld [vmem:[#allocation8 + $0x30] sm:$0xff]
    %v1310 = vld [vmem:[#allocation8 + $0x38] sm:$0xff]
    %v1311 = vld [vmem:[#allocation8 + $0x40] sm:$0xff]
    %v1312 = vld [vmem:[#allocation8 + $0x48] sm:$0xff]
    %v1313 = vld [vmem:[#allocation8 + $0x50] sm:$0xff]
    %v1314 = vld [vmem:[#allocation8 + $0x58] sm:$0xff]
    %v1315 = vld [vmem:[#allocation8 + $0x60] sm:$0xff]
    %v1316 = vld [vmem:[#allocation8 + $0x68] sm:$0xff]
    %v1317 = vld [vmem:[#allocation8 + $0x70] sm:$0xff]
    %v1318 = vld [vmem:[#allocation8 + $0x78] sm:$0xff]
    %v1319 = vld [vmem:[#allocation8 + $0x80] sm:$0xff]
    %v1320 = vld [vmem:[#allocation8 + $0x88] sm:$0xff]
    %v1321 = vld [vmem:[#allocation8 + $0x90] sm:$0xff]
    %v1322 = vld [vmem:[#allocation8 + $0x98] sm:$0xff]
    %v1323 = vld [vmem:[#allocation8 + $0xa0] sm:$0xff]
    %v1324 = vld [vmem:[#allocation8 + $0xa8] sm:$0xff]
    %v1325 = vld [vmem:[#allocation8 + $0xb0] sm:$0xff]
    %v1326 = vld [vmem:[#allocation8 + $0xb8] sm:$0xff]
    %v1327 = vld [vmem:[#allocation8 + $0xc0] sm:$0xff]
    %v1328 = vld [vmem:[#allocation8 + $0xc8] sm:$0xff]
    %v1329 = vld [vmem:[#allocation8 + $0xd0] sm:$0xff]
    %v1330 = vld [vmem:[#allocation8 + $0xd8] sm:$0xff]
    %v1331 = vld [vmem:[#allocation8 + $0xe0] sm:$0xff]
    %v1332 = vld [vmem:[#allocation8 + $0xe8] sm:$0xff]
    %v1333 = vld [vmem:[#allocation8 + $0xf0] sm:$0xff]
    %v1334 = vld [vmem:[#allocation8 + $0xf8] sm:$0xff]
    %v1335 = vld [vmem:[#allocation8 + $0x100] sm:$0xff]
    %v1336 = vld [vmem:[#allocation8 + $0x108] sm:$0xff]
    %v1337 = vld [vmem:[#allocation8 + $0x110] sm:$0xff]
    %v1338 = vld [vmem:[#allocation8 + $0x118] sm:$0xff]
    %v1339 = vld [vmem:[#allocation8 + $0x120] sm:$0xff]
    %v1340 = vld [vmem:[#allocation8 + $0x128] sm:$0xff]
    %v1341 = vld [vmem:[#allocation8 + $0x130] sm:$0xff]
    %v1342 = vld [vmem:[#allocation8 + $0x138] sm:$0xff]
    %v1343 = vld [vmem:[#allocation8 + $0x140] sm:$0xff]
    %v1344 = vld [vmem:[#allocation8 + $0x148] sm:$0xff]
    %v1345 = vld [vmem:[#allocation8 + $0x150] sm:$0xff]
    %v1346 = vld [vmem:[#allocation8 + $0x158] sm:$0xff]
    %v1347 = vld [vmem:[#allocation8 + $0x160] sm:$0xff]
    %v1348 = vld [vmem:[#allocation8 + $0x168] sm:$0xff]
    %v1349 = vld [vmem:[#allocation8 + $0x170] sm:$0xff]
    %v1350 = vld [vmem:[#allocation8 + $0x178] sm:$0xff]
    %v1351 = vld [vmem:[#allocation8 + $0x180] sm:$0xff]
    %v1352 = vld [vmem:[#allocation8 + $0x188] sm:$0xff]
    %v1353 = vld [vmem:[#allocation8 + $0x190] sm:$0xff]
    %v1354 = vld [vmem:[#allocation8 + $0x198] sm:$0xff]
    %v1355 = vld [vmem:[#allocation8 + $0x1a0] sm:$0xff]
    %v1356 = vld [vmem:[#allocation8 + $0x1a8] sm:$0xff]
    %v1357 = vld [vmem:[#allocation8 + $0x1b0] sm:$0xff]
    %v1358 = vld [vmem:[#allocation8 + $0x1b8] sm:$0xff]
    %v1359 = vld [vmem:[#allocation8 + $0x1c0] sm:$0xff]
    %v1360 = vld [vmem:[#allocation8 + $0x1c8] sm:$0xff]
    %v1361 = vld [vmem:[#allocation8 + $0x1d0] sm:$0xff]
    %v1362 = vld [vmem:[#allocation8 + $0x1d8] sm:$0xff]
    %v1363 = vld [vmem:[#allocation8 + $0x1e0] sm:$0xff]
    %v1364 = vld [vmem:[#allocation8 + $0x1e8] sm:$0xff]
    %v1365 = vld [vmem:[#allocation8 + $0x1f0] sm:$0xff]
    %v1366 = vld [vmem:[#allocation8 + $0x1f8] sm:$0xff]
    %v1367 = vld [vmem:[#allocation8 + $0x200] sm:$0xff]
    %v1368 = vld [vmem:[#allocation8 + $0x208] sm:$0xff]
    %v1369 = vld [vmem:[#allocation8 + $0x210] sm:$0xff]
    %v1370 = vld [vmem:[#allocation8 + $0x218] sm:$0xff]
    %v1371 = vld [vmem:[#allocation8 + $0x220] sm:$0xff]
    %v1372 = vld [vmem:[#allocation8 + $0x228] sm:$0xff]
    %v1373 = vld [vmem:[#allocation8 + $0x230] sm:$0xff]
    %v1374 = vld [vmem:[#allocation8 + $0x238] sm:$0xff]
    %v1375 = vld [vmem:[#allocation8 + $0x240] sm:$0xff]
    %v1376 = vld [vmem:[#allocation8 + $0x248] sm:$0xff]
    %v1377 = vld [vmem:[#allocation8 + $0x250] sm:$0xff]
    %v1378 = vld [vmem:[#allocation8 + $0x258] sm:$0xff]
    %v1379 = vld [vmem:[#allocation8 + $0x260] sm:$0xff]
    %v1380 = vld [vmem:[#allocation8 + $0x268] sm:$0xff]
    %v1381 = vld [vmem:[#allocation8 + $0x270] sm:$0xff]
    %v1382 = vld [vmem:[#allocation8 + $0x278] sm:$0xff]
    %v1383 = vld [vmem:[#allocation8 + $0x280] sm:$0xff]
    %v1384 = vld [vmem:[#allocation8 + $0x288] sm:$0xff]
    %v1385 = vld [vmem:[#allocation8 + $0x290] sm:$0xff]
    %v1386 = vld [vmem:[#allocation8 + $0x298] sm:$0xff]
    %v1387 = vld [vmem:[#allocation8 + $0x2a0] sm:$0xff]
    %v1388 = vld [vmem:[#allocation8 + $0x2a8] sm:$0xff]
    %v1389 = vld [vmem:[#allocation8 + $0x2b0] sm:$0xff]
    %v1390 = vld [vmem:[#allocation8 + $0x2b8] sm:$0xff]
    %v1391 = vld [vmem:[#allocation8 + $0x2c0] sm:$0xff]
    %v1392 = vld [vmem:[#allocation8 + $0x2c8] sm:$0xff]
    %v1393 = vld [vmem:[#allocation8 + $0x2d0] sm:$0xff]
    %v1394 = vld [vmem:[#allocation8 + $0x2d8] sm:$0xff]
    %v1395 = vld [vmem:[#allocation8 + $0x2e0] sm:$0xff]
    %v1396 = vld [vmem:[#allocation8 + $0x2e8] sm:$0xff]
    %v1397 = vld [vmem:[#allocation8 + $0x2f0] sm:$0xff]
    %v1398 = vld [vmem:[#allocation8 + $0x2f8] sm:$0xff]
    %v1399 = vld [vmem:[#allocation8 + $0x300] sm:$0xff]
    %v1400 = vld [vmem:[#allocation8 + $0x308] sm:$0xff]
    %v1401 = vld [vmem:[#allocation8 + $0x310] sm:$0xff]
    %v1402 = vld [vmem:[#allocation8 + $0x318] sm:$0xff]
    %v1403 = vld [vmem:[#allocation8 + $0x320] sm:$0xff]
    %v1404 = vld [vmem:[#allocation8 + $0x328] sm:$0xff]
    %v1405 = vld [vmem:[#allocation8 + $0x330] sm:$0xff]
    %v1406 = vld [vmem:[#allocation8 + $0x338] sm:$0xff]
    %v1407 = vld [vmem:[#allocation8 + $0x340] sm:$0xff]
    %v1408 = vld [vmem:[#allocation8 + $0x348] sm:$0xff]
    %v1409 = vld [vmem:[#allocation8 + $0x350] sm:$0xff]
    %v1410 = vld [vmem:[#allocation8 + $0x358] sm:$0xff]
    %v1411 = vld [vmem:[#allocation8 + $0x360] sm:$0xff]
    %v1412 = vld [vmem:[#allocation8 + $0x368] sm:$0xff]
    %v1413 = vld [vmem:[#allocation8 + $0x370] sm:$0xff]
    %v1414 = vld [vmem:[#allocation8 + $0x378] sm:$0xff]
    %v1415 = vld [vmem:[#allocation8 + $0x380] sm:$0xff]
    %v1416 = vld [vmem:[#allocation8 + $0x388] sm:$0xff]
    %v1417 = vld [vmem:[#allocation8 + $0x390] sm:$0xff]
    %v1418 = vld [vmem:[#allocation8 + $0x398] sm:$0xff]
    %v1419 = vld [vmem:[#allocation8 + $0x3a0] sm:$0xff]
    %v1420 = vld [vmem:[#allocation8 + $0x3a8] sm:$0xff]
    %v1421 = vld [vmem:[#allocation8 + $0x3b0] sm:$0xff]
    %v1422 = vld [vmem:[#allocation8 + $0x3b8] sm:$0xff]
    %v1423 = vld [vmem:[#allocation8 + $0x3c0] sm:$0xff]
    %v1424 = vld [vmem:[#allocation8 + $0x3c8] sm:$0xff]
    %v1425 = vld [vmem:[#allocation8 + $0x3d0] sm:$0xff]
    %v1426 = vld [vmem:[#allocation8 + $0x3d8] sm:$0xff]
    %v1427 = vld [vmem:[#allocation8 + $0x3e0] sm:$0xff]
    %v1428 = vld [vmem:[#allocation8 + $0x3e8] sm:$0xff]
    %v1429 = vld [vmem:[#allocation8 + $0x3f0] sm:$0xff]
    %v1430 = vld [vmem:[#allocation8 + $0x3f8] sm:$0xff]
    %v1431 = vld [vmem:[%s6] sm:$0xf]
    %v1433 = vlaneseq
    %v1434 = vshrl.u32 %v1433, 7
    %v1435 = vsub.s32 0, %v1434
    %v1436 = vrot.slane %v1431, %v1435
    %v1437 = vlaneseq
    %v1438 = vshrl.u32 %v1437, 7
    %v1439 = vsub.s32 1, %v1438
    %v1440 = vrot.slane %v1431, %v1439
    %v1441 = vlaneseq
    %v1442 = vshrl.u32 %v1441, 7
    %v1443 = vsub.s32 2, %v1442
    %v1444 = vrot.slane %v1431, %v1443
    %v1445 = vlaneseq
    %v1446 = vshrl.u32 %v1445, 7
    %v1447 = vsub.s32 3, %v1446
    %v1448 = vrot.slane %v1431, %v1447
    %v1581 = vunpack.c.l.b16 %v1303
    %v1582 = vunpack.c.h.b16 %v1303
    %v1583 = vunpack.c.l.b16 %v1304
    %v1584 = vunpack.c.h.b16 %v1304
    %v1585 = vunpack.c.l.b16 %v1305
    %v1586 = vunpack.c.h.b16 %v1305
    %v1587 = vunpack.c.l.b16 %v1306
    %v1588 = vunpack.c.h.b16 %v1306
    %v1589 = vunpack.c.l.b16 %v1307
    %v1590 = vunpack.c.h.b16 %v1307
    %v1591 = vunpack.c.l.b16 %v1308
    %v1592 = vunpack.c.h.b16 %v1308
    %v1593 = vunpack.c.l.b16 %v1309
    %v1594 = vunpack.c.h.b16 %v1309
    %v1595 = vunpack.c.l.b16 %v1310
    %v1596 = vunpack.c.h.b16 %v1310
    %v1597 = vunpack.c.l.b16 %v1311
    %v1598 = vunpack.c.h.b16 %v1311
    %v1599 = vunpack.c.l.b16 %v1312
    %v1600 = vunpack.c.h.b16 %v1312
    %v1601 = vunpack.c.l.b16 %v1313
    %v1602 = vunpack.c.h.b16 %v1313
    %v1603 = vunpack.c.l.b16 %v1314
    %v1604 = vunpack.c.h.b16 %v1314
    %v1605 = vunpack.c.l.b16 %v1315
    %v1606 = vunpack.c.h.b16 %v1315
    %v1607 = vunpack.c.l.b16 %v1316
    %v1608 = vunpack.c.h.b16 %v1316
    %v1609 = vunpack.c.l.b16 %v1317
    %v1610 = vunpack.c.h.b16 %v1317
    %v1611 = vunpack.c.l.b16 %v1318
    %v1612 = vunpack.c.h.b16 %v1318
    %v1613 = vunpack.c.l.b16 %v1319
    %v1614 = vunpack.c.h.b16 %v1319
    %v1615 = vunpack.c.l.b16 %v1320
    %v1616 = vunpack.c.h.b16 %v1320
    %v1617 = vunpack.c.l.b16 %v1321
    %v1618 = vunpack.c.h.b16 %v1321
    %v1619 = vunpack.c.l.b16 %v1322
    %v1620 = vunpack.c.h.b16 %v1322
    %v1621 = vunpack.c.l.b16 %v1323
    %v1622 = vunpack.c.h.b16 %v1323
    %v1623 = vunpack.c.l.b16 %v1324
    %v1624 = vunpack.c.h.b16 %v1324
    %v1625 = vunpack.c.l.b16 %v1325
    %v1626 = vunpack.c.h.b16 %v1325
    %v1627 = vunpack.c.l.b16 %v1326
    %v1628 = vunpack.c.h.b16 %v1326
    %v1629 = vunpack.c.l.b16 %v1327
    %v1630 = vunpack.c.h.b16 %v1327
    %v1631 = vunpack.c.l.b16 %v1328
    %v1632 = vunpack.c.h.b16 %v1328
    %v1633 = vunpack.c.l.b16 %v1329
    %v1634 = vunpack.c.h.b16 %v1329
    %v1635 = vunpack.c.l.b16 %v1330
    %v1636 = vunpack.c.h.b16 %v1330
    %v1637 = vunpack.c.l.b16 %v1331
    %v1638 = vunpack.c.h.b16 %v1331
    %v1639 = vunpack.c.l.b16 %v1332
    %v1640 = vunpack.c.h.b16 %v1332
    %v1641 = vunpack.c.l.b16 %v1333
    %v1642 = vunpack.c.h.b16 %v1333
    %v1643 = vunpack.c.l.b16 %v1334
    %v1644 = vunpack.c.h.b16 %v1334
    %v1645 = vunpack.c.l.b16 %v1335
    %v1646 = vunpack.c.h.b16 %v1335
    %v1647 = vunpack.c.l.b16 %v1336
    %v1648 = vunpack.c.h.b16 %v1336
    %v1649 = vunpack.c.l.b16 %v1337
    %v1650 = vunpack.c.h.b16 %v1337
    %v1651 = vunpack.c.l.b16 %v1338
    %v1652 = vunpack.c.h.b16 %v1338
    %v1653 = vunpack.c.l.b16 %v1339
    %v1654 = vunpack.c.h.b16 %v1339
    %v1655 = vunpack.c.l.b16 %v1340
    %v1656 = vunpack.c.h.b16 %v1340
    %v1657 = vunpack.c.l.b16 %v1341
    %v1658 = vunpack.c.h.b16 %v1341
    %v1659 = vunpack.c.l.b16 %v1342
    %v1660 = vunpack.c.h.b16 %v1342
    %v1661 = vunpack.c.l.b16 %v1343
    %v1662 = vunpack.c.h.b16 %v1343
    %v1663 = vunpack.c.l.b16 %v1344
    %v1664 = vunpack.c.h.b16 %v1344
    %v1665 = vunpack.c.l.b16 %v1345
    %v1666 = vunpack.c.h.b16 %v1345
    %v1667 = vunpack.c.l.b16 %v1346
    %v1668 = vunpack.c.h.b16 %v1346
    %v1669 = vunpack.c.l.b16 %v1347
    %v1670 = vunpack.c.h.b16 %v1347
    %v1671 = vunpack.c.l.b16 %v1348
    %v1672 = vunpack.c.h.b16 %v1348
    %v1673 = vunpack.c.l.b16 %v1349
    %v1674 = vunpack.c.h.b16 %v1349
    %v1675 = vunpack.c.l.b16 %v1350
    %v1676 = vunpack.c.h.b16 %v1350
    %v1677 = vunpack.c.l.b16 %v1351
    %v1678 = vunpack.c.h.b16 %v1351
    %v1679 = vunpack.c.l.b16 %v1352
    %v1680 = vunpack.c.h.b16 %v1352
    %v1681 = vunpack.c.l.b16 %v1353
    %v1682 = vunpack.c.h.b16 %v1353
    %v1683 = vunpack.c.l.b16 %v1354
    %v1684 = vunpack.c.h.b16 %v1354
    %v1685 = vunpack.c.l.b16 %v1355
    %v1686 = vunpack.c.h.b16 %v1355
    %v1687 = vunpack.c.l.b16 %v1356
    %v1688 = vunpack.c.h.b16 %v1356
    %v1689 = vunpack.c.l.b16 %v1357
    %v1690 = vunpack.c.h.b16 %v1357
    %v1691 = vunpack.c.l.b16 %v1358
    %v1692 = vunpack.c.h.b16 %v1358
    %v1693 = vunpack.c.l.b16 %v1359
    %v1694 = vunpack.c.h.b16 %v1359
    %v1695 = vunpack.c.l.b16 %v1360
    %v1696 = vunpack.c.h.b16 %v1360
    %v1697 = vunpack.c.l.b16 %v1361
    %v1698 = vunpack.c.h.b16 %v1361
    %v1699 = vunpack.c.l.b16 %v1362
    %v1700 = vunpack.c.h.b16 %v1362
    %v1701 = vunpack.c.l.b16 %v1363
    %v1702 = vunpack.c.h.b16 %v1363
    %v1703 = vunpack.c.l.b16 %v1364
    %v1704 = vunpack.c.h.b16 %v1364
    %v1705 = vunpack.c.l.b16 %v1365
    %v1706 = vunpack.c.h.b16 %v1365
    %v1707 = vunpack.c.l.b16 %v1366
    %v1708 = vunpack.c.h.b16 %v1366
    %v1709 = vunpack.c.l.b16 %v1367
    %v1710 = vunpack.c.h.b16 %v1367
    %v1711 = vunpack.c.l.b16 %v1368
    %v1712 = vunpack.c.h.b16 %v1368
    %v1713 = vunpack.c.l.b16 %v1369
    %v1714 = vunpack.c.h.b16 %v1369
    %v1715 = vunpack.c.l.b16 %v1370
    %v1716 = vunpack.c.h.b16 %v1370
    %v1717 = vunpack.c.l.b16 %v1371
    %v1718 = vunpack.c.h.b16 %v1371
    %v1719 = vunpack.c.l.b16 %v1372
    %v1720 = vunpack.c.h.b16 %v1372
    %v1721 = vunpack.c.l.b16 %v1373
    %v1722 = vunpack.c.h.b16 %v1373
    %v1723 = vunpack.c.l.b16 %v1374
    %v1724 = vunpack.c.h.b16 %v1374
    %v1725 = vunpack.c.l.b16 %v1375
    %v1726 = vunpack.c.h.b16 %v1375
    %v1727 = vunpack.c.l.b16 %v1376
    %v1728 = vunpack.c.h.b16 %v1376
    %v1729 = vunpack.c.l.b16 %v1377
    %v1730 = vunpack.c.h.b16 %v1377
    %v1731 = vunpack.c.l.b16 %v1378
    %v1732 = vunpack.c.h.b16 %v1378
    %v1733 = vunpack.c.l.b16 %v1379
    %v1734 = vunpack.c.h.b16 %v1379
    %v1735 = vunpack.c.l.b16 %v1380
    %v1736 = vunpack.c.h.b16 %v1380
    %v1737 = vunpack.c.l.b16 %v1381
    %v1738 = vunpack.c.h.b16 %v1381
    %v1739 = vunpack.c.l.b16 %v1382
    %v1740 = vunpack.c.h.b16 %v1382
    %v1741 = vunpack.c.l.b16 %v1383
    %v1742 = vunpack.c.h.b16 %v1383
    %v1743 = vunpack.c.l.b16 %v1384
    %v1744 = vunpack.c.h.b16 %v1384
    %v1745 = vunpack.c.l.b16 %v1385
    %v1746 = vunpack.c.h.b16 %v1385
    %v1747 = vunpack.c.l.b16 %v1386
    %v1748 = vunpack.c.h.b16 %v1386
    %v1749 = vunpack.c.l.b16 %v1387
    %v1750 = vunpack.c.h.b16 %v1387
    %v1751 = vunpack.c.l.b16 %v1388
    %v1752 = vunpack.c.h.b16 %v1388
    %v1753 = vunpack.c.l.b16 %v1389
    %v1754 = vunpack.c.h.b16 %v1389
    %v1755 = vunpack.c.l.b16 %v1390
    %v1756 = vunpack.c.h.b16 %v1390
    %v1757 = vunpack.c.l.b16 %v1391
    %v1758 = vunpack.c.h.b16 %v1391
    %v1759 = vunpack.c.l.b16 %v1392
    %v1760 = vunpack.c.h.b16 %v1392
    %v1761 = vunpack.c.l.b16 %v1393
    %v1762 = vunpack.c.h.b16 %v1393
    %v1763 = vunpack.c.l.b16 %v1394
    %v1764 = vunpack.c.h.b16 %v1394
    %v1765 = vunpack.c.l.b16 %v1395
    %v1766 = vunpack.c.h.b16 %v1395
    %v1767 = vunpack.c.l.b16 %v1396
    %v1768 = vunpack.c.h.b16 %v1396
    %v1769 = vunpack.c.l.b16 %v1397
    %v1770 = vunpack.c.h.b16 %v1397
    %v1771 = vunpack.c.l.b16 %v1398
    %v1772 = vunpack.c.h.b16 %v1398
    %v1773 = vunpack.c.l.b16 %v1399
    %v1774 = vunpack.c.h.b16 %v1399
    %v1775 = vunpack.c.l.b16 %v1400
    %v1776 = vunpack.c.h.b16 %v1400
    %v1777 = vunpack.c.l.b16 %v1401
    %v1778 = vunpack.c.h.b16 %v1401
    %v1779 = vunpack.c.l.b16 %v1402
    %v1780 = vunpack.c.h.b16 %v1402
    %v1781 = vunpack.c.l.b16 %v1403
    %v1782 = vunpack.c.h.b16 %v1403
    %v1783 = vunpack.c.l.b16 %v1404
    %v1784 = vunpack.c.h.b16 %v1404
    %v1785 = vunpack.c.l.b16 %v1405
    %v1786 = vunpack.c.h.b16 %v1405
    %v1787 = vunpack.c.l.b16 %v1406
    %v1788 = vunpack.c.h.b16 %v1406
    %v1789 = vunpack.c.l.b16 %v1407
    %v1790 = vunpack.c.h.b16 %v1407
    %v1791 = vunpack.c.l.b16 %v1408
    %v1792 = vunpack.c.h.b16 %v1408
    %v1793 = vunpack.c.l.b16 %v1409
    %v1794 = vunpack.c.h.b16 %v1409
    %v1795 = vunpack.c.l.b16 %v1410
    %v1796 = vunpack.c.h.b16 %v1410
    %v1797 = vunpack.c.l.b16 %v1411
    %v1798 = vunpack.c.h.b16 %v1411
    %v1799 = vunpack.c.l.b16 %v1412
    %v1800 = vunpack.c.h.b16 %v1412
    %v1801 = vunpack.c.l.b16 %v1413
    %v1802 = vunpack.c.h.b16 %v1413
    %v1803 = vunpack.c.l.b16 %v1414
    %v1804 = vunpack.c.h.b16 %v1414
    %v1805 = vunpack.c.l.b16 %v1415
    %v1806 = vunpack.c.h.b16 %v1415
    %v1807 = vunpack.c.l.b16 %v1416
    %v1808 = vunpack.c.h.b16 %v1416
    %v1809 = vunpack.c.l.b16 %v1417
    %v1810 = vunpack.c.h.b16 %v1417
    %v1811 = vunpack.c.l.b16 %v1418
    %v1812 = vunpack.c.h.b16 %v1418
    %v1813 = vunpack.c.l.b16 %v1419
    %v1814 = vunpack.c.h.b16 %v1419
    %v1815 = vunpack.c.l.b16 %v1420
    %v1816 = vunpack.c.h.b16 %v1420
    %v1817 = vunpack.c.l.b16 %v1421
    %v1818 = vunpack.c.h.b16 %v1421
    %v1819 = vunpack.c.l.b16 %v1422
    %v1820 = vunpack.c.h.b16 %v1422
    %v1821 = vunpack.c.l.b16 %v1423
    %v1822 = vunpack.c.h.b16 %v1423
    %v1823 = vunpack.c.l.b16 %v1424
    %v1824 = vunpack.c.h.b16 %v1424
    %v1825 = vunpack.c.l.b16 %v1425
    %v1826 = vunpack.c.h.b16 %v1425
    %v1827 = vunpack.c.l.b16 %v1426
    %v1828 = vunpack.c.h.b16 %v1426
    %v1829 = vunpack.c.l.b16 %v1427
    %v1830 = vunpack.c.h.b16 %v1427
    %v1831 = vunpack.c.l.b16 %v1428
    %v1832 = vunpack.c.h.b16 %v1428
    %v1833 = vunpack.c.l.b16 %v1429
    %v1834 = vunpack.c.h.b16 %v1429
    %v1835 = vunpack.c.l.b16 %v1430
    %v1836 = vunpack.c.h.b16 %v1430
    %v1837 = vpack.c.b16 %v1585, %v1581
    %v1838 = vpack.c.b16 %v1586, %v1582
    %v1839 = vpack.c.b16 %v1587, %v1583
    %v1840 = vpack.c.b16 %v1588, %v1584
    %v1841 = vpack.c.b16 %v1593, %v1589
    %v1842 = vpack.c.b16 %v1594, %v1590
    %v1843 = vpack.c.b16 %v1595, %v1591
    %v1844 = vpack.c.b16 %v1596, %v1592
    %v1845 = vpack.c.b16 %v1601, %v1597
    %v1846 = vpack.c.b16 %v1602, %v1598
    %v1847 = vpack.c.b16 %v1603, %v1599
    %v1848 = vpack.c.b16 %v1604, %v1600
    %v1849 = vpack.c.b16 %v1609, %v1605
    %v1850 = vpack.c.b16 %v1610, %v1606
    %v1851 = vpack.c.b16 %v1611, %v1607
    %v1852 = vpack.c.b16 %v1612, %v1608
    %v1853 = vpack.c.b16 %v1617, %v1613
    %v1854 = vpack.c.b16 %v1618, %v1614
    %v1855 = vpack.c.b16 %v1619, %v1615
    %v1856 = vpack.c.b16 %v1620, %v1616
    %v1857 = vpack.c.b16 %v1625, %v1621
    %v1858 = vpack.c.b16 %v1626, %v1622
    %v1859 = vpack.c.b16 %v1627, %v1623
    %v1860 = vpack.c.b16 %v1628, %v1624
    %v1861 = vpack.c.b16 %v1633, %v1629
    %v1862 = vpack.c.b16 %v1634, %v1630
    %v1863 = vpack.c.b16 %v1635, %v1631
    %v1864 = vpack.c.b16 %v1636, %v1632
    %v1865 = vpack.c.b16 %v1641, %v1637
    %v1866 = vpack.c.b16 %v1642, %v1638
    %v1867 = vpack.c.b16 %v1643, %v1639
    %v1868 = vpack.c.b16 %v1644, %v1640
    %v1869 = vpack.c.b16 %v1649, %v1645
    %v1870 = vpack.c.b16 %v1650, %v1646
    %v1871 = vpack.c.b16 %v1651, %v1647
    %v1872 = vpack.c.b16 %v1652, %v1648
    %v1873 = vpack.c.b16 %v1657, %v1653
    %v1874 = vpack.c.b16 %v1658, %v1654
    %v1875 = vpack.c.b16 %v1659, %v1655
    %v1876 = vpack.c.b16 %v1660, %v1656
    %v1877 = vpack.c.b16 %v1665, %v1661
    %v1878 = vpack.c.b16 %v1666, %v1662
    %v1879 = vpack.c.b16 %v1667, %v1663
    %v1880 = vpack.c.b16 %v1668, %v1664
    %v1881 = vpack.c.b16 %v1673, %v1669
    %v1882 = vpack.c.b16 %v1674, %v1670
    %v1883 = vpack.c.b16 %v1675, %v1671
    %v1884 = vpack.c.b16 %v1676, %v1672
    %v1885 = vpack.c.b16 %v1681, %v1677
    %v1886 = vpack.c.b16 %v1682, %v1678
    %v1887 = vpack.c.b16 %v1683, %v1679
    %v1888 = vpack.c.b16 %v1684, %v1680
    %v1889 = vpack.c.b16 %v1689, %v1685
    %v1890 = vpack.c.b16 %v1690, %v1686
    %v1891 = vpack.c.b16 %v1691, %v1687
    %v1892 = vpack.c.b16 %v1692, %v1688
    %v1893 = vpack.c.b16 %v1697, %v1693
    %v1894 = vpack.c.b16 %v1698, %v1694
    %v1895 = vpack.c.b16 %v1699, %v1695
    %v1896 = vpack.c.b16 %v1700, %v1696
    %v1897 = vpack.c.b16 %v1705, %v1701
    %v1898 = vpack.c.b16 %v1706, %v1702
    %v1899 = vpack.c.b16 %v1707, %v1703
    %v1900 = vpack.c.b16 %v1708, %v1704
    %v1901 = vpack.c.b16 %v1713, %v1709
    %v1902 = vpack.c.b16 %v1714, %v1710
    %v1903 = vpack.c.b16 %v1715, %v1711
    %v1904 = vpack.c.b16 %v1716, %v1712
    %v1905 = vpack.c.b16 %v1721, %v1717
    %v1906 = vpack.c.b16 %v1722, %v1718
    %v1907 = vpack.c.b16 %v1723, %v1719
    %v1908 = vpack.c.b16 %v1724, %v1720
    %v1909 = vpack.c.b16 %v1729, %v1725
    %v1910 = vpack.c.b16 %v1730, %v1726
    %v1911 = vpack.c.b16 %v1731, %v1727
    %v1912 = vpack.c.b16 %v1732, %v1728
    %v1913 = vpack.c.b16 %v1737, %v1733
    %v1914 = vpack.c.b16 %v1738, %v1734
    %v1915 = vpack.c.b16 %v1739, %v1735
    %v1916 = vpack.c.b16 %v1740, %v1736
    %v1917 = vpack.c.b16 %v1745, %v1741
    %v1918 = vpack.c.b16 %v1746, %v1742
    %v1919 = vpack.c.b16 %v1747, %v1743
    %v1920 = vpack.c.b16 %v1748, %v1744
    %v1921 = vpack.c.b16 %v1753, %v1749
    %v1922 = vpack.c.b16 %v1754, %v1750
    %v1923 = vpack.c.b16 %v1755, %v1751
    %v1924 = vpack.c.b16 %v1756, %v1752
    %v1925 = vpack.c.b16 %v1761, %v1757
    %v1926 = vpack.c.b16 %v1762, %v1758
    %v1927 = vpack.c.b16 %v1763, %v1759
    %v1928 = vpack.c.b16 %v1764, %v1760
    %v1929 = vpack.c.b16 %v1769, %v1765
    %v1930 = vpack.c.b16 %v1770, %v1766
    %v1931 = vpack.c.b16 %v1771, %v1767
    %v1932 = vpack.c.b16 %v1772, %v1768
    %v1933 = vpack.c.b16 %v1777, %v1773
    %v1934 = vpack.c.b16 %v1778, %v1774
    %v1935 = vpack.c.b16 %v1779, %v1775
    %v1936 = vpack.c.b16 %v1780, %v1776
    %v1937 = vpack.c.b16 %v1785, %v1781
    %v1938 = vpack.c.b16 %v1786, %v1782
    %v1939 = vpack.c.b16 %v1787, %v1783
    %v1940 = vpack.c.b16 %v1788, %v1784
    %v1941 = vpack.c.b16 %v1793, %v1789
    %v1942 = vpack.c.b16 %v1794, %v1790
    %v1943 = vpack.c.b16 %v1795, %v1791
    %v1944 = vpack.c.b16 %v1796, %v1792
    %v1945 = vpack.c.b16 %v1801, %v1797
    %v1946 = vpack.c.b16 %v1802, %v1798
    %v1947 = vpack.c.b16 %v1803, %v1799
    %v1948 = vpack.c.b16 %v1804, %v1800
    %v1949 = vpack.c.b16 %v1809, %v1805
    %v1950 = vpack.c.b16 %v1810, %v1806
    %v1951 = vpack.c.b16 %v1811, %v1807
    %v1952 = vpack.c.b16 %v1812, %v1808
    %v1953 = vpack.c.b16 %v1817, %v1813
    %v1954 = vpack.c.b16 %v1818, %v1814
    %v1955 = vpack.c.b16 %v1819, %v1815
    %v1956 = vpack.c.b16 %v1820, %v1816
    %v1957 = vpack.c.b16 %v1825, %v1821
    %v1958 = vpack.c.b16 %v1826, %v1822
    %v1959 = vpack.c.b16 %v1827, %v1823
    %v1960 = vpack.c.b16 %v1828, %v1824
    %v1961 = vpack.c.b16 %v1833, %v1829
    %v1962 = vpack.c.b16 %v1834, %v1830
    %v1963 = vpack.c.b16 %v1835, %v1831
    %v1964 = vpack.c.b16 %v1836, %v1832
    %2093 = vmatprep.subr.bf16.mxu0 %v1838
    %2094 = vmatpush1.bf16.msra.mxu0 %v1837
    %2095 = vmatprep.subr.bf16.mxu0 %v1842
    %2096 = vmatpush1.bf16.msra.mxu0 %v1841
    %2097 = vmatprep.subr.bf16.mxu0 %v1846
    %2098 = vmatpush1.bf16.msra.mxu0 %v1845
    %2099 = vmatprep.subr.bf16.mxu0 %v1850
    %2100 = vmatpush1.bf16.msra.mxu0 %v1849
    %2101 = vmatprep.subr.bf16.mxu0 %v1854
    %2102 = vmatpush1.bf16.msra.mxu0 %v1853
    %2103 = vmatprep.subr.bf16.mxu0 %v1858
    %2104 = vmatpush1.bf16.msra.mxu0 %v1857
    %2105 = vmatprep.subr.bf16.mxu0 %v1862
    %2106 = vmatpush1.bf16.msra.mxu0 %v1861
    %2107 = vmatprep.subr.bf16.mxu0 %v1866
    %2108 = vmatpush1.bf16.msra.mxu0 %v1865
    %2109 = vmatprep.subr.bf16.mxu0 %v1870
    %2110 = vmatpush1.bf16.msra.mxu0 %v1869
    %2111 = vmatprep.subr.bf16.mxu0 %v1874
    %2112 = vmatpush1.bf16.msra.mxu0 %v1873
    %2113 = vmatprep.subr.bf16.mxu0 %v1878
    %2114 = vmatpush1.bf16.msra.mxu0 %v1877
    %2115 = vmatprep.subr.bf16.mxu0 %v1882
    %2116 = vmatpush1.bf16.msra.mxu0 %v1881
    %2117 = vmatprep.subr.bf16.mxu0 %v1886
    %2118 = vmatpush1.bf16.msra.mxu0 %v1885
    %2119 = vmatprep.subr.bf16.mxu0 %v1890
    %2120 = vmatpush1.bf16.msra.mxu0 %v1889
    %2121 = vmatprep.subr.bf16.mxu0 %v1894
    %2122 = vmatpush1.bf16.msra.mxu0 %v1893
    %2123 = vmatprep.subr.bf16.mxu0 %v1898
    %2124 = vmatpush1.bf16.msra.mxu0 %v1897
    %2125 = vmatprep.mubr.bf16.mxu0 %v1300
    %2126 = vmatmul.mubr.bf16.gmra.mrb[0].mxu0 %v1299
    %v2127 = vpop.f32.mrb[0].mxu0
    %v2128 = vadd.f32 %v1436, %v2127
    %v2129 = vpop.f32.mrb[0].mxu0
    %v2130 = vadd.f32 %v1440, %v2129
    %v2131 = vpop.f32.mrb[0].mxu0
    %v2132 = vadd.f32 %v1436, %v2131
    %v2133 = vpop.f32.mrb[0].mxu0
    %v2134 = vadd.f32 %v1440, %v2133
    %2135 = vdwg.mxu0
    %2136 = vmatprep.subr.bf16.mxu0 %v1902
    %2137 = vmatpush1.bf16.msra.mxu0 %v1901
    %2138 = vmatprep.subr.bf16.mxu0 %v1906
    %2139 = vmatpush1.bf16.msra.mxu0 %v1905
    %2140 = vmatprep.subr.bf16.mxu0 %v1910
    %2141 = vmatpush1.bf16.msra.mxu0 %v1909
    %2142 = vmatprep.subr.bf16.mxu0 %v1914
    %2143 = vmatpush1.bf16.msra.mxu0 %v1913
    %2144 = vmatprep.subr.bf16.mxu0 %v1918
    %2145 = vmatpush1.bf16.msra.mxu0 %v1917
    %2146 = vmatprep.subr.bf16.mxu0 %v1922
    %2147 = vmatpush1.bf16.msra.mxu0 %v1921
    %2148 = vmatprep.subr.bf16.mxu0 %v1926
    %2149 = vmatpush1.bf16.msra.mxu0 %v1925
    %2150 = vmatprep.subr.bf16.mxu0 %v1930
    %2151 = vmatpush1.bf16.msra.mxu0 %v1929
    %2152 = vmatprep.subr.bf16.mxu0 %v1934
    %2153 = vmatpush1.bf16.msra.mxu0 %v1933
    %2154 = vmatprep.subr.bf16.mxu0 %v1938
    %2155 = vmatpush1.bf16.msra.mxu0 %v1937
    %2156 = vmatprep.subr.bf16.mxu0 %v1942
    %2157 = vmatpush1.bf16.msra.mxu0 %v1941
    %2158 = vmatprep.subr.bf16.mxu0 %v1946
    %2159 = vmatpush1.bf16.msra.mxu0 %v1945
    %2160 = vmatprep.subr.bf16.mxu0 %v1950
    %2161 = vmatpush1.bf16.msra.mxu0 %v1949
    %2162 = vmatprep.subr.bf16.mxu0 %v1954
    %2163 = vmatpush1.bf16.msra.mxu0 %v1953
    %2164 = vmatprep.subr.bf16.mxu0 %v1958
    %2165 = vmatpush1.bf16.msra.mxu0 %v1957
    %2166 = vmatprep.subr.bf16.mxu0 %v1962
    %2167 = vmatpush1.bf16.msra.mxu0 %v1961
    %2168 = vmatprep.mubr.bf16.mxu0 %v1302
    %2169 = vmatmul.mubr.bf16.gmra.mrb[0].mxu0 %v1301
    %v2170 = vpop.f32.mrb[0].mxu0
    %v2171 = vadd.f32 %v2128, %v2170
    %v2172 = vpop.f32.mrb[0].mxu0
    %v2173 = vadd.f32 %v2130, %v2172
    %v2174 = vpop.f32.mrb[0].mxu0
    %v2175 = vadd.f32 %v2132, %v2174
    %v2176 = vpop.f32.mrb[0].mxu0
    %v2177 = vadd.f32 %v2134, %v2176
    %2178 = vdwg.mxu0
    %2179 = vmatprep.subr.bf16.mxu0 %v1840
    %2180 = vmatpush1.bf16.msra.mxu0 %v1839
    %2181 = vmatprep.subr.bf16.mxu0 %v1844
    %2182 = vmatpush1.bf16.msra.mxu0 %v1843
    %2183 = vmatprep.subr.bf16.mxu0 %v1848
    %2184 = vmatpush1.bf16.msra.mxu0 %v1847
    %2185 = vmatprep.subr.bf16.mxu0 %v1852
    %2186 = vmatpush1.bf16.msra.mxu0 %v1851
    %2187 = vmatprep.subr.bf16.mxu0 %v1856
    %2188 = vmatpush1.bf16.msra.mxu0 %v1855
    %2189 = vmatprep.subr.bf16.mxu0 %v1860
    %2190 = vmatpush1.bf16.msra.mxu0 %v1859
    %2191 = vmatprep.subr.bf16.mxu0 %v1864
    %2192 = vmatpush1.bf16.msra.mxu0 %v1863
    %2193 = vmatprep.subr.bf16.mxu0 %v1868
    %2194 = vmatpush1.bf16.msra.mxu0 %v1867
    %2195 = vmatprep.subr.bf16.mxu0 %v1872
    %2196 = vmatpush1.bf16.msra.mxu0 %v1871
    %2197 = vmatprep.subr.bf16.mxu0 %v1876
    %2198 = vmatpush1.bf16.msra.mxu0 %v1875
    %2199 = vmatprep.subr.bf16.mxu0 %v1880
    %2200 = vmatpush1.bf16.msra.mxu0 %v1879
    %2201 = vmatprep.subr.bf16.mxu0 %v1884
    %2202 = vmatpush1.bf16.msra.mxu0 %v1883
    %2203 = vmatprep.subr.bf16.mxu0 %v1888
    %2204 = vmatpush1.bf16.msra.mxu0 %v1887
    %2205 = vmatprep.subr.bf16.mxu0 %v1892
    %2206 = vmatpush1.bf16.msra.mxu0 %v1891
    %2207 = vmatprep.subr.bf16.mxu0 %v1896
    %2208 = vmatpush1.bf16.msra.mxu0 %v1895
    %2209 = vmatprep.subr.bf16.mxu0 %v1900
    %2210 = vmatpush1.bf16.msra.mxu0 %v1899
    %2211 = vmatprep.mubr.bf16.mxu0 %v1300
    %2212 = vmatmul.mubr.bf16.gmra.mrb[0].mxu0 %v1299
    %v2213 = vpop.f32.mrb[0].mxu0
    %v2214 = vadd.f32 %v1444, %v2213
    %v2215 = vpop.f32.mrb[0].mxu0
    %v2216 = vadd.f32 %v1448, %v2215
    %v2217 = vpop.f32.mrb[0].mxu0
    %v2218 = vadd.f32 %v1444, %v2217
    %v2219 = vpop.f32.mrb[0].mxu0
    %v2220 = vadd.f32 %v1448, %v2219
    %2221 = vdwg.mxu0
    %2222 = vmatprep.subr.bf16.mxu0 %v1904
    %2223 = vmatpush1.bf16.msra.mxu0 %v1903
    %2224 = vmatprep.subr.bf16.mxu0 %v1908
    %2225 = vmatpush1.bf16.msra.mxu0 %v1907
    %2226 = vmatprep.subr.bf16.mxu0 %v1912
    %2227 = vmatpush1.bf16.msra.mxu0 %v1911
    %2228 = vmatprep.subr.bf16.mxu0 %v1916
    %2229 = vmatpush1.bf16.msra.mxu0 %v1915
    %2230 = vmatprep.subr.bf16.mxu0 %v1920
    %2231 = vmatpush1.bf16.msra.mxu0 %v1919
    %2232 = vmatprep.subr.bf16.mxu0 %v1924
    %2233 = vmatpush1.bf16.msra.mxu0 %v1923
    %2234 = vmatprep.subr.bf16.mxu0 %v1928
    %2235 = vmatpush1.bf16.msra.mxu0 %v1927
    %2236 = vmatprep.subr.bf16.mxu0 %v1932
    %2237 = vmatpush1.bf16.msra.mxu0 %v1931
    %2238 = vmatprep.subr.bf16.mxu0 %v1936
    %2239 = vmatpush1.bf16.msra.mxu0 %v1935
    %2240 = vmatprep.subr.bf16.mxu0 %v1940
    %2241 = vmatpush1.bf16.msra.mxu0 %v1939
    %2242 = vmatprep.subr.bf16.mxu0 %v1944
    %2243 = vmatpush1.bf16.msra.mxu0 %v1943
    %2244 = vmatprep.subr.bf16.mxu0 %v1948
    %2245 = vmatpush1.bf16.msra.mxu0 %v1947
    %2246 = vmatprep.subr.bf16.mxu0 %v1952
    %2247 = vmatpush1.bf16.msra.mxu0 %v1951
    %2248 = vmatprep.subr.bf16.mxu0 %v1956
    %2249 = vmatpush1.bf16.msra.mxu0 %v1955
    %2250 = vmatprep.subr.bf16.mxu0 %v1960
    %2251 = vmatpush1.bf16.msra.mxu0 %v1959
    %2252 = vmatprep.subr.bf16.mxu0 %v1964
    %2253 = vmatpush1.bf16.msra.mxu0 %v1963
    %2254 = vmatprep.mubr.bf16.mxu0 %v1302
    %2255 = vmatmul.mubr.bf16.gmra.mrb[0].mxu0 %v1301
    %v2256 = vpop.f32.mrb[0].mxu0
    %v2257 = vadd.f32 %v2214, %v2256
    %v2258 = vpop.f32.mrb[0].mxu0
    %v2259 = vadd.f32 %v2216, %v2258
    %v2260 = vpop.f32.mrb[0].mxu0
    %v2261 = vadd.f32 %v2218, %v2260
    %v2262 = vpop.f32.mrb[0].mxu0
    %v2263 = vadd.f32 %v2220, %v2262
    %2264 = vdwg.mxu0
    %v2265 = vmul.f32 %v2171, 0.5
    %v2266 = vmul.f32 %v2173, 0.5
    %v2267 = vmul.f32 %v2257, 0.5
    %v2268 = vmul.f32 %v2259, 0.5
    %v2269 = vmul.f32 %v2175, 0.5
    %v2270 = vmul.f32 %v2177, 0.5
    %v2271 = vmul.f32 %v2261, 0.5
    %v2272 = vmul.f32 %v2263, 0.5
    %v2273 = vtanh.pop %v2265
    %v2274 = vtanh.pop %v2266
    %v2275 = vtanh.pop %v2267
    %v2276 = vtanh.pop %v2268
    %v2277 = vtanh.pop %v2269
    %v2278 = vtanh.pop %v2270
    %v2279 = vtanh.pop %v2271
    %v2280 = vtanh.pop %v2272
    %v2281 = vadd.f32 %v2273, 1.0
    %v2282 = vadd.f32 %v2274, 1.0
    %v2283 = vadd.f32 %v2275, 1.0
    %v2284 = vadd.f32 %v2276, 1.0
    %v2285 = vadd.f32 %v2277, 1.0
    %v2286 = vadd.f32 %v2278, 1.0
    %v2287 = vadd.f32 %v2279, 1.0
    %v2288 = vadd.f32 %v2280, 1.0
    %v2289 = vmul.f32 %v2265, %v2281
    %v2290 = vmul.f32 %v2266, %v2282
    %v2291 = vmul.f32 %v2267, %v2283
    %v2292 = vmul.f32 %v2268, %v2284
    %v2293 = vmul.f32 %v2269, %v2285
    %v2294 = vmul.f32 %v2270, %v2286
    %v2295 = vmul.f32 %v2271, %v2287
    %v2296 = vmul.f32 %v2272, %v2288
    %v2297 = vpack.c.bf16 %v2293, %v2289
    %v2298 = vpack.c.bf16 %v2294, %v2290
    %v2299 = vpack.c.bf16 %v2295, %v2291
    %v2300 = vpack.c.bf16 %v2296, %v2292
    %v2301 = vld [vmem:[#allocation10] sm:$0xf]
    %v2302 = vld [vmem:[#allocation10 + $0x4] sm:$0xf]
    %v2303 = vld [vmem:[#allocation10 + $0x8] sm:$0xf]
    %v2304 = vld [vmem:[#allocation10 + $0xc] sm:$0xf]
    %v2305 = vld [vmem:[#allocation10 + $0x10] sm:$0xf]
    %v2306 = vld [vmem:[#allocation10 + $0x14] sm:$0xf]
    %v2307 = vld [vmem:[#allocation10 + $0x18] sm:$0xf]
    %v2308 = vld [vmem:[#allocation10 + $0x1c] sm:$0xf]
    %v2309 = vld [vmem:[#allocation10 + $0x20] sm:$0xf]
    %v2310 = vld [vmem:[#allocation10 + $0x24] sm:$0xf]
    %v2311 = vld [vmem:[#allocation10 + $0x28] sm:$0xf]
    %v2312 = vld [vmem:[#allocation10 + $0x2c] sm:$0xf]
    %v2313 = vld [vmem:[#allocation10 + $0x30] sm:$0xf]
    %v2314 = vld [vmem:[#allocation10 + $0x34] sm:$0xf]
    %v2315 = vld [vmem:[#allocation10 + $0x38] sm:$0xf]
    %v2316 = vld [vmem:[#allocation10 + $0x3c] sm:$0xf]
    %v2317 = vld [vmem:[#allocation10 + $0x40] sm:$0xf]
    %v2318 = vld [vmem:[#allocation10 + $0x44] sm:$0xf]
    %v2319 = vld [vmem:[#allocation10 + $0x48] sm:$0xf]
    %v2320 = vld [vmem:[#allocation10 + $0x4c] sm:$0xf]
    %v2321 = vld [vmem:[#allocation10 + $0x50] sm:$0xf]
    %v2322 = vld [vmem:[#allocation10 + $0x54] sm:$0xf]
    %v2323 = vld [vmem:[#allocation10 + $0x58] sm:$0xf]
    %v2324 = vld [vmem:[#allocation10 + $0x5c] sm:$0xf]
    %v2325 = vld [vmem:[#allocation10 + $0x60] sm:$0xf]
    %v2326 = vld [vmem:[#allocation10 + $0x64] sm:$0xf]
    %v2327 = vld [vmem:[#allocation10 + $0x68] sm:$0xf]
    %v2328 = vld [vmem:[#allocation10 + $0x6c] sm:$0xf]
    %v2329 = vld [vmem:[#allocation10 + $0x70] sm:$0xf]
    %v2330 = vld [vmem:[#allocation10 + $0x74] sm:$0xf]
    %v2331 = vld [vmem:[#allocation10 + $0x78] sm:$0xf]
    %v2332 = vld [vmem:[#allocation10 + $0x7c] sm:$0xf]
    %v2333 = vld [vmem:[#allocation10 + $0x80] sm:$0xf]
    %v2334 = vld [vmem:[#allocation10 + $0x84] sm:$0xf]
    %v2335 = vld [vmem:[#allocation10 + $0x88] sm:$0xf]
    %v2336 = vld [vmem:[#allocation10 + $0x8c] sm:$0xf]
    %v2337 = vld [vmem:[#allocation10 + $0x90] sm:$0xf]
    %v2338 = vld [vmem:[#allocation10 + $0x94] sm:$0xf]
    %v2339 = vld [vmem:[#allocation10 + $0x98] sm:$0xf]
    %v2340 = vld [vmem:[#allocation10 + $0x9c] sm:$0xf]
    %v2341 = vld [vmem:[#allocation10 + $0xa0] sm:$0xf]
    %v2342 = vld [vmem:[#allocation10 + $0xa4] sm:$0xf]
    %v2343 = vld [vmem:[#allocation10 + $0xa8] sm:$0xf]
    %v2344 = vld [vmem:[#allocation10 + $0xac] sm:$0xf]
    %v2345 = vld [vmem:[#allocation10 + $0xb0] sm:$0xf]
    %v2346 = vld [vmem:[#allocation10 + $0xb4] sm:$0xf]
    %v2347 = vld [vmem:[#allocation10 + $0xb8] sm:$0xf]
    %v2348 = vld [vmem:[#allocation10 + $0xbc] sm:$0xf]
    %v2349 = vld [vmem:[#allocation10 + $0xc0] sm:$0xf]
    %v2350 = vld [vmem:[#allocation10 + $0xc4] sm:$0xf]
    %v2351 = vld [vmem:[#allocation10 + $0xc8] sm:$0xf]
    %v2352 = vld [vmem:[#allocation10 + $0xcc] sm:$0xf]
    %v2353 = vld [vmem:[#allocation10 + $0xd0] sm:$0xf]
    %v2354 = vld [vmem:[#allocation10 + $0xd4] sm:$0xf]
    %v2355 = vld [vmem:[#allocation10 + $0xd8] sm:$0xf]
    %v2356 = vld [vmem:[#allocation10 + $0xdc] sm:$0xf]
    %v2357 = vld [vmem:[#allocation10 + $0xe0] sm:$0xf]
    %v2358 = vld [vmem:[#allocation10 + $0xe4] sm:$0xf]
    %v2359 = vld [vmem:[#allocation10 + $0xe8] sm:$0xf]
    %v2360 = vld [vmem:[#allocation10 + $0xec] sm:$0xf]
    %v2361 = vld [vmem:[#allocation10 + $0xf0] sm:$0xf]
    %v2362 = vld [vmem:[#allocation10 + $0xf4] sm:$0xf]
    %v2363 = vld [vmem:[#allocation10 + $0xf8] sm:$0xf]
    %v2364 = vld [vmem:[#allocation10 + $0xfc] sm:$0xf]
    %v2365 = vld [vmem:[%s8] sm:$0x1]
    %v2367 = vlaneseq
    %v2368 = vshrl.u32 %v2367, 7
    %v2369 = vsub.s32 0, %v2368
    %v2370 = vrot.slane %v2365, %v2369
    %v2436 = vunpack.c.l.b16 %v2301
    %v2437 = vunpack.c.l.b16 %v2302
    %v2438 = vunpack.c.l.b16 %v2303
    %v2439 = vunpack.c.l.b16 %v2304
    %v2440 = vunpack.c.l.b16 %v2305
    %v2441 = vunpack.c.l.b16 %v2306
    %v2442 = vunpack.c.l.b16 %v2307
    %v2443 = vunpack.c.l.b16 %v2308
    %v2444 = vunpack.c.l.b16 %v2309
    %v2445 = vunpack.c.l.b16 %v2310
    %v2446 = vunpack.c.l.b16 %v2311
    %v2447 = vunpack.c.l.b16 %v2312
    %v2448 = vunpack.c.l.b16 %v2313
    %v2449 = vunpack.c.l.b16 %v2314
    %v2450 = vunpack.c.l.b16 %v2315
    %v2451 = vunpack.c.l.b16 %v2316
    %v2452 = vunpack.c.l.b16 %v2317
    %v2453 = vunpack.c.l.b16 %v2318
    %v2454 = vunpack.c.l.b16 %v2319
    %v2455 = vunpack.c.l.b16 %v2320
    %v2456 = vunpack.c.l.b16 %v2321
    %v2457 = vunpack.c.l.b16 %v2322
    %v2458 = vunpack.c.l.b16 %v2323
    %v2459 = vunpack.c.l.b16 %v2324
    %v2460 = vunpack.c.l.b16 %v2325
    %v2461 = vunpack.c.l.b16 %v2326
    %v2462 = vunpack.c.l.b16 %v2327
    %v2463 = vunpack.c.l.b16 %v2328
    %v2464 = vunpack.c.l.b16 %v2329
    %v2465 = vunpack.c.l.b16 %v2330
    %v2466 = vunpack.c.l.b16 %v2331
    %v2467 = vunpack.c.l.b16 %v2332
    %v2468 = vunpack.c.l.b16 %v2333
    %v2469 = vunpack.c.l.b16 %v2334
    %v2470 = vunpack.c.l.b16 %v2335
    %v2471 = vunpack.c.l.b16 %v2336
    %v2472 = vunpack.c.l.b16 %v2337
    %v2473 = vunpack.c.l.b16 %v2338
    %v2474 = vunpack.c.l.b16 %v2339
    %v2475 = vunpack.c.l.b16 %v2340
    %v2476 = vunpack.c.l.b16 %v2341
    %v2477 = vunpack.c.l.b16 %v2342
    %v2478 = vunpack.c.l.b16 %v2343
    %v2479 = vunpack.c.l.b16 %v2344
    %v2480 = vunpack.c.l.b16 %v2345
    %v2481 = vunpack.c.l.b16 %v2346
    %v2482 = vunpack.c.l.b16 %v2347
    %v2483 = vunpack.c.l.b16 %v2348
    %v2484 = vunpack.c.l.b16 %v2349
    %v2485 = vunpack.c.l.b16 %v2350
    %v2486 = vunpack.c.l.b16 %v2351
    %v2487 = vunpack.c.l.b16 %v2352
    %v2488 = vunpack.c.l.b16 %v2353
    %v2489 = vunpack.c.l.b16 %v2354
    %v2490 = vunpack.c.l.b16 %v2355
    %v2491 = vunpack.c.l.b16 %v2356
    %v2492 = vunpack.c.l.b16 %v2357
    %v2493 = vunpack.c.l.b16 %v2358
    %v2494 = vunpack.c.l.b16 %v2359
    %v2495 = vunpack.c.l.b16 %v2360
    %v2496 = vunpack.c.l.b16 %v2361
    %v2497 = vunpack.c.l.b16 %v2362
    %v2498 = vunpack.c.l.b16 %v2363
    %v2499 = vunpack.c.l.b16 %v2364
    %v2500 = vpack.c.b16 %v2437, %v2436
    %v2501 = vpack.c.b16 %v2439, %v2438
    %v2502 = vpack.c.b16 %v2441, %v2440
    %v2503 = vpack.c.b16 %v2443, %v2442
    %v2504 = vpack.c.b16 %v2445, %v2444
    %v2505 = vpack.c.b16 %v2447, %v2446
    %v2506 = vpack.c.b16 %v2449, %v2448
    %v2507 = vpack.c.b16 %v2451, %v2450
    %v2508 = vpack.c.b16 %v2453, %v2452
    %v2509 = vpack.c.b16 %v2455, %v2454
    %v2510 = vpack.c.b16 %v2457, %v2456
    %v2511 = vpack.c.b16 %v2459, %v2458
    %v2512 = vpack.c.b16 %v2461, %v2460
    %v2513 = vpack.c.b16 %v2463, %v2462
    %v2514 = vpack.c.b16 %v2465, %v2464
    %v2515 = vpack.c.b16 %v2467, %v2466
    %v2516 = vpack.c.b16 %v2469, %v2468
    %v2517 = vpack.c.b16 %v2471, %v2470
    %v2518 = vpack.c.b16 %v2473, %v2472
    %v2519 = vpack.c.b16 %v2475, %v2474
    %v2520 = vpack.c.b16 %v2477, %v2476
    %v2521 = vpack.c.b16 %v2479, %v2478
    %v2522 = vpack.c.b16 %v2481, %v2480
    %v2523 = vpack.c.b16 %v2483, %v2482
    %v2524 = vpack.c.b16 %v2485, %v2484
    %v2525 = vpack.c.b16 %v2487, %v2486
    %v2526 = vpack.c.b16 %v2489, %v2488
    %v2527 = vpack.c.b16 %v2491, %v2490
    %v2528 = vpack.c.b16 %v2493, %v2492
    %v2529 = vpack.c.b16 %v2495, %v2494
    %v2530 = vpack.c.b16 %v2497, %v2496
    %v2531 = vpack.c.b16 %v2499, %v2498
    %2564 = vmatprep.subr.bf16.mxu0 0
    %2565 = vmatpush1.bf16.msra.mxu0 %v2500
    %2566 = vmatprep.subr.bf16.mxu0 0
    %2567 = vmatpush1.bf16.msra.mxu0 %v2501
    %2568 = vmatprep.subr.bf16.mxu0 0
    %2569 = vmatpush1.bf16.msra.mxu0 %v2502
    %2570 = vmatprep.subr.bf16.mxu0 0
    %2571 = vmatpush1.bf16.msra.mxu0 %v2503
    %2572 = vmatprep.subr.bf16.mxu0 0
    %2573 = vmatpush1.bf16.msra.mxu0 %v2504
    %2574 = vmatprep.subr.bf16.mxu0 0
    %2575 = vmatpush1.bf16.msra.mxu0 %v2505
    %2576 = vmatprep.subr.bf16.mxu0 0
    %2577 = vmatpush1.bf16.msra.mxu0 %v2506
    %2578 = vmatprep.subr.bf16.mxu0 0
    %2579 = vmatpush1.bf16.msra.mxu0 %v2507
    %2580 = vmatprep.subr.bf16.mxu0 0
    %2581 = vmatpush1.bf16.msra.mxu0 %v2508
    %2582 = vmatprep.subr.bf16.mxu0 0
    %2583 = vmatpush1.bf16.msra.mxu0 %v2509
    %2584 = vmatprep.subr.bf16.mxu0 0
    %2585 = vmatpush1.bf16.msra.mxu0 %v2510
    %2586 = vmatprep.subr.bf16.mxu0 0
    %2587 = vmatpush1.bf16.msra.mxu0 %v2511
    %2588 = vmatprep.subr.bf16.mxu0 0
    %2589 = vmatpush1.bf16.msra.mxu0 %v2512
    %2590 = vmatprep.subr.bf16.mxu0 0
    %2591 = vmatpush1.bf16.msra.mxu0 %v2513
    %2592 = vmatprep.subr.bf16.mxu0 0
    %2593 = vmatpush1.bf16.msra.mxu0 %v2514
    %2594 = vmatprep.subr.bf16.mxu0 0
    %2595 = vmatpush1.bf16.msra.mxu0 %v2515
    %2596 = vmatprep.mubr.bf16.mxu0 %v2298
    %2597 = vmatmul.mubr.bf16.gmra.mrb[0].mxu0 %v2297
    %v2598 = vpop.f32.mrb[0].mxu0
    %v2599 = vadd.f32 %v2370, %v2598
    %v2600 = vpop.f32.mrb[0].mxu0
    %v2601 = vpop.f32.mrb[0].mxu0
    %v2602 = vadd.f32 %v2370, %v2601
    %v2603 = vpop.f32.mrb[0].mxu0
    %2604 = vdwg.mxu0
    %2605 = vmatprep.subr.bf16.mxu0 0
    %2606 = vmatpush1.bf16.msra.mxu0 %v2516
    %2607 = vmatprep.subr.bf16.mxu0 0
    %2608 = vmatpush1.bf16.msra.mxu0 %v2517
    %2609 = vmatprep.subr.bf16.mxu0 0
    %2610 = vmatpush1.bf16.msra.mxu0 %v2518
    %2611 = vmatprep.subr.bf16.mxu0 0
    %2612 = vmatpush1.bf16.msra.mxu0 %v2519
    %2613 = vmatprep.subr.bf16.mxu0 0
    %2614 = vmatpush1.bf16.msra.mxu0 %v2520
    %2615 = vmatprep.subr.bf16.mxu0 0
    %2616 = vmatpush1.bf16.msra.mxu0 %v2521
    %2617 = vmatprep.subr.bf16.mxu0 0
    %2618 = vmatpush1.bf16.msra.mxu0 %v2522
    %2619 = vmatprep.subr.bf16.mxu0 0
    %2620 = vmatpush1.bf16.msra.mxu0 %v2523
    %2621 = vmatprep.subr.bf16.mxu0 0
    %2622 = vmatpush1.bf16.msra.mxu0 %v2524
    %2623 = vmatprep.subr.bf16.mxu0 0
    %2624 = vmatpush1.bf16.msra.mxu0 %v2525
    %2625 = vmatprep.subr.bf16.mxu0 0
    %2626 = vmatpush1.bf16.msra.mxu0 %v2526
    %2627 = vmatprep.subr.bf16.mxu0 0
    %2628 = vmatpush1.bf16.msra.mxu0 %v2527
    %2629 = vmatprep.subr.bf16.mxu0 0
    %2630 = vmatpush1.bf16.msra.mxu0 %v2528
    %2631 = vmatprep.subr.bf16.mxu0 0
    %2632 = vmatpush1.bf16.msra.mxu0 %v2529
    %2633 = vmatprep.subr.bf16.mxu0 0
    %2634 = vmatpush1.bf16.msra.mxu0 %v2530
    %2635 = vmatprep.subr.bf16.mxu0 0
    %2636 = vmatpush1.bf16.msra.mxu0 %v2531
    %2637 = vmatprep.mubr.bf16.mxu0 %v2300
    %2638 = vmatmul.mubr.bf16.gmra.mrb[0].mxu0 %v2299
    %v2639 = vpop.f32.mrb[0].mxu0
    %v2640 = vadd.f32 %v2599, %v2639
    %v2641 = vpop.f32.mrb[0].mxu0
    %v2642 = vpop.f32.mrb[0].mxu0
    %v2643 = vadd.f32 %v2602, %v2642
    %v2644 = vpop.f32.mrb[0].mxu0
    %2645 = vdwg.mxu0
    %2646 = vst [vmem:[#allocation11] sm:$0xff] %v2640
    %2647 = vst [vmem:[#allocation11 + $0x8] sm:$0xff] %v2643
    // Predicated region
    $region58: #{tpu_custom_call.1} parent=1 // pred_check
      _
    $region59: #{tpu_custom_call.1} parent=1 // pred_check_branch
      %2649 = sbr.rel (0) target = $region61
    $region60: #{tpu_custom_call.1} parent=1 // pred_region
      %s2651 = ssub.s32 256, 256
      %2652 = vsyncadd [#allocation4], %s2651
      %s2653 = sshll.u32 [#allocation11], 4
      %s2654 = int_to_ptr.vmem [resolvable:$true] %s2653
      %2659 = dma.vmem_to_hbm [thread:$0]  %s2654, 256, %s9, [#allocation4], 128, 128, 8
    $region61: #{tpu_custom_call.1} parent=1 // pred_fallthru
      _
    // Predicated region
    $region62: #{tpu_custom_call.1} parent=1 // pred_check
      _
    $region63: #{tpu_custom_call.1} parent=1 // pred_check_branch
      %2661 = sbr.rel (0) target = $region65
    $region64: #{tpu_custom_call.1} parent=1 // pred_region
      %2662 = dma.done [#allocation4], 256
    $region65: #{tpu_custom_call.1} parent=1 // pred_fallthru
      _
    %2663 = vsyncpa [#allocation3], 1
    %2664 = vsyncpa [#allocation6], 1
    %2665 = vsyncpa [#allocation9], 1
    %2666 = vsyncpa [#allocation4], 1

</llo_original>
